<compile_context>
chip_gen: v6e
topology: v6e:2x2x1
jax: 0.10.0
libtpu: 0.0.40
codegen_flags: <defaults>
</compile_context>

<pallas_src>
import functools

import numpy as np
import jax
import jax.numpy as jnp
from jax import lax
from jax.experimental import pallas as pl
from jax.experimental.pallas import tpu as pltpu

# ---------------- configuration (small, deterministic) ----------------------
INPUT_DIM = 4
HIDDEN = 8
OUTPUT_DIM = 4
HEADS = 2
NUM_GAT_LAYERS = 3
NUM_MLP_LAYERS = 2            # -> one hidden Linear+ReLU + final Linear
GRID_H = GRID_W = 4           # each "image" is a 4x4 pixel grid graph
NUM_GRAPHS = 2
NODES_PER_GRAPH = GRID_H * GRID_W          # 16
NUM_NODES = NUM_GRAPHS * NODES_PER_GRAPH   # 32
NEG_SLOPE = 0.2               # GATConv default LeakyReLU negative_slope
NEG_INF = -1e30

_DN_LAST = (((1,), (1,)), ((), ()))        # contract last dims of both operands


# ---------------- fused Pallas kernel ----------------------------------------
def _gat_layer(h, w_aug, csrc_t, bias, mask_bias, *, heads, out_ch, concat, apply_elu):
    """One GATConv layer on a single graph, dense formulation, fully VMEM-resident.

    h:         (n, f_in)                     node features of this graph
    w_aug:     (f_in, heads*out_ch + heads)  [per-head W (head-major) | W_h @ att_dst_h]
    csrc_t:    (heads, f_in)                 per-head (W_h @ att_src_h)^T
    bias:      (1, out_dim)
    mask_bias: (n, n)                        0 on edges (incl. self loop), -1e30 else
    """
    hc = heads * out_ch
    # Batched per-head projection + folded <xh, att_dst> columns: ONE MXU matmul.
    proj = jnp.dot(h, w_aug, preferred_element_type=jnp.float32)     # (n, hc+heads)
    xh_all = proj[:, :hc]                                            # (n, heads*C)
    a_dst = proj[:, hc:]                                             # (n, heads)
    # <xh, att_src> for all heads as ROWS, directly from h (one small MXU op,
    # contract-last dims of both operands -> no transpose/relayout needed).
    a_src = lax.dot_general(csrc_t, h, _DN_LAST,
                            preferred_element_type=jnp.float32)      # (heads, n)

    outs = []
    for hd in range(heads):
        # e[i, j] = <xh_i, att_dst> + <xh_j, att_src>
        e = a_dst[:, hd:hd + 1] + a_src[hd:hd + 1, :]                # (n, n)
        e = jnp.where(e > 0, e, NEG_SLOPE * e)                       # LeakyReLU
        e = e + mask_bias                                            # additive mask
        # softmax over neighbours j of each target node i (row-wise)
        m = jnp.max(e, axis=-1, keepdims=True)
        p = jnp.exp(e - m)
        denom = jnp.sum(p, axis=-1, keepdims=True)
        agg = jnp.dot(p, xh_all[:, hd * out_ch:(hd + 1) * out_ch],
                      preferred_element_type=jnp.float32)            # (n, C)
        # normalisation folded into the aggregation output; reciprocal runs on EUP
        outs.append(agg * pl.reciprocal(denom, approx=True))

    if concat:
        out = jnp.concatenate(outs, axis=-1)                         # (n, H*C)
    else:
        acc = outs[0]
        for o in outs[1:]:
            acc = acc + o
        out = acc * (1.0 / heads)                                    # (n, C)

    out = out + bias
    if apply_elu:                                                    # F.elu
        out = jnp.where(out > 0, out, jnp.exp(out) - 1.0)
    return out


def _fused_pixel_gat_kernel(x_ref, maskb_ref,
                            wa0_ref, cs0_ref, b0_ref,
                            wa1_ref, cs1_ref, b1_ref,
                            wa2_ref, cs2_ref, b2_ref,
                            mw1_ref, mb1_ref, mw2_ref, mb2_ref,
                            out_ref, *, heads, hidden):
    """Whole PixelGAT forward for ONE graph (grid point): 3 GAT layers + pool + MLP."""
    mask_bias = maskb_ref[...]          # loaded once, reused by every layer/head
    h = x_ref[...]                      # evolving features stay VMEM/vreg-resident

    layers = ((wa0_ref, cs0_ref, b0_ref, True),
              (wa1_ref, cs1_ref, b1_ref, True),
              (wa2_ref, cs2_ref, b2_ref, False))
    for wa_ref, cs_ref, b_ref, concat in layers:
        h = _gat_layer(h, wa_ref[...], cs_ref[...], b_ref[...], mask_bias,
                       heads=heads, out_ch=hidden, concat=concat, apply_elu=concat)

    # global_mean_pool over this graph's nodes (tiny matmul against a constant row)
    n = h.shape[0]
    pool_row = jnp.full((1, n), 1.0 / n, jnp.float32)
    pooled = jnp.dot(pool_row, h, preferred_element_type=jnp.float32)     # (1, hidden)

    # MLP head: Linear -> (Dropout=id) -> ReLU -> Linear
    z = jnp.dot(pooled, mw1_ref[...], preferred_element_type=jnp.float32) + mb1_ref[...]
    z = jnp.maximum(z, 0.0)
    out = jnp.dot(z, mw2_ref[...], preferred_element_type=jnp.float32) + mb2_ref[...]
    out_ref[...] = out.reshape(out_ref.shape)                              # (1,1,out)


# ---------------- wrapper ------------------------------------------------------
def _fold_gat_layer(lp):
    """Host-side parameter prep: batch heads and fold attention vectors."""
    w, att_src, att_dst = lp["w"], lp["att_src"], lp["att_dst"]
    n_heads, f_in, c = w.shape
    w_all = jnp.transpose(w, (1, 0, 2)).reshape(f_in, n_heads * c)   # (f_in, H*C)
    c_dst = jnp.einsum("hfc,hc->fh", w, att_dst)                     # (f_in, H)
    w_aug = jnp.concatenate([w_all, c_dst], axis=1)                  # (f_in, H*C+H)
    csrc_t = jnp.einsum("hfc,hc->hf", w, att_src)                    # (H, f_in)
    return w_aug, csrc_t, lp["bias"]


def pixel_gat_forward(x, params, mask_bias):
    inputs = [x, mask_bias]
    for lp in params["gat"]:
        inputs.extend(_fold_gat_layer(lp))
    inputs.extend([params["mlp_w1"], params["mlp_b1"],
                   params["mlp_w2"], params["mlp_b2"]])

    # per-graph block of node features; every other input is a small full-array block
    in_specs = [pl.BlockSpec((NODES_PER_GRAPH, INPUT_DIM), lambda g: (g, 0))]
    for a in inputs[1:]:
        in_specs.append(pl.BlockSpec(a.shape, lambda g, nd=a.ndim: (0,) * nd))

    out = pl.pallas_call(
        functools.partial(_fused_pixel_gat_kernel, heads=HEADS, hidden=HIDDEN),
        out_shape=jax.ShapeDtypeStruct((NUM_GRAPHS, 1, OUTPUT_DIM), jnp.float32),
        grid=(NUM_GRAPHS,),
        in_specs=in_specs,
        out_specs=pl.BlockSpec((1, 1, OUTPUT_DIM), lambda g: (g, 0, 0)),
        compiler_params=pltpu.CompilerParams(
            dimension_semantics=("parallel",)),      # v7x: one graph per TensorCore
    )(*inputs)
    return out.reshape(NUM_GRAPHS, OUTPUT_DIM)


# ---------------- pure-JAX reference (unfolded params, dense adjacency) -------
def _gat_layer_ref(x, w, att_src, att_dst, bias, mask, concat, apply_elu):
    outs = []
    for h in range(HEADS):
        xh = x @ w[h]
        a_s = xh @ att_src[h]
        a_d = xh @ att_dst[h]
        e = a_d[:, None] + a_s[None, :]
        e = jnp.where(e > 0, e, NEG_SLOPE * e)
        e = jnp.where(mask > 0, e, NEG_INF)
        alpha = jax.nn.softmax(e, axis=-1)
        outs.append(alpha @ xh)
    out = jnp.concatenate(outs, -1) if concat else sum(outs) / float(HEADS)
    out = out + bias
    if apply_elu:
        out = jnp.where(out > 0, out, jnp.exp(out) - 1.0)
    return out


def pixel_gat_ref(x, params, adj_mask, pool_mat):
    h = x
    n_layers = len(params["gat"])
    for li, lp in enumerate(params["gat"]):
        concat = li < n_layers - 1
        h = _gat_layer_ref(h, lp["w"], lp["att_src"], lp["att_dst"], lp["bias"],
                           adj_mask, concat, concat)
    pooled = pool_mat @ h
    m = jnp.maximum(pooled @ params["mlp_w1"] + params["mlp_b1"], 0.0)
    return m @ params["mlp_w2"] + params["mlp_b2"]


# ---------------- graph / parameter construction -----------------------------
def build_single_grid_adj():
    """Dense adjacency (4-connectivity + self loops) of ONE GRID_H x GRID_W image."""
    adj = np.zeros((NODES_PER_GRAPH, NODES_PER_GRAPH), np.float32)
    for r in range(GRID_H):
        for c in range(GRID_W):
            i = r * GRID_W + c
            adj[i, i] = 1.0                       # self loop (add_self_loops=True)
            for dr, dc in ((1, 0), (-1, 0), (0, 1), (0, -1)):
                rr, cc = r + dr, c + dc
                if 0 <= rr < GRID_H and 0 <= cc < GRID_W:
                    adj[i, rr * GRID_W + cc] = 1.0
    return adj


def init_params(key):
    def normal(k, shape, scale):
        return (scale * jax.random.normal(k, shape)).astype(jnp.float32)

    params = {"gat": []}
    in_d = INPUT_DIM
    for li in range(NUM_GAT_LAYERS):
        concat = li < NUM_GAT_LAYERS - 1
        key, kw, ks, kd, kb = jax.random.split(key, 5)
        out_dim = HEADS * HIDDEN if concat else HIDDEN
        params["gat"].append(dict(
            w=normal(kw, (HEADS, in_d, HIDDEN), 1.0 / np.sqrt(in_d)),
            att_src=normal(ks, (HEADS, HIDDEN), 1.0 / np.sqrt(HIDDEN)),
            att_dst=normal(kd, (HEADS, HIDDEN), 1.0 / np.sqrt(HIDDEN)),
            bias=normal(kb, (1, out_dim), 0.02),
        ))
        in_d = HEADS * HIDDEN
    key, k1, k2, k3, k4 = jax.random.split(key, 5)
    params["mlp_w1"] = normal(k1, (HIDDEN, HIDDEN), 1.0 / np.sqrt(HIDDEN))
    params["mlp_b1"] = normal(k2, (1, HIDDEN), 0.02)
    params["mlp_w2"] = normal(k3, (HIDDEN, OUTPUT_DIM), 1.0 / np.sqrt(HIDDEN))
    params["mlp_b2"] = normal(k4, (1, OUTPUT_DIM), 0.02)
    return params


# TODO(synk): dropout and the 'laplacian'/'sinusoidal' PE branches are not taken
#             in this configuration (eval mode, pe=''); they are omitted rather
#             than faked.

if __name__ == "__main__":
    key = jax.random.PRNGKey(0)
    key, kx = jax.random.split(key)
    params = init_params(key)

    adj_single = build_single_grid_adj()                       # (16, 16), shared by all graphs
    # additive attention-mask bias: 0 on edges, -1e30 elsewhere (replaces compare+select)
    mask_bias = jnp.asarray((adj_single - 1.0) * np.float32(1e30))
    # dense block-diagonal adjacency / pooling matrix, used only by the reference
    adj_dense = jnp.asarray(np.kron(np.eye(NUM_GRAPHS, dtype=np.float32), adj_single))
    pool_mat = jnp.asarray(np.kron(np.eye(NUM_GRAPHS, dtype=np.float32),
                                   np.full((1, NODES_PER_GRAPH),
                                           1.0 / NODES_PER_GRAPH, np.float32)))

    # node features for 2 graphs of 4x4 pixels, 4 channels each -> x: (32, 4)
    x = jax.random.normal(kx, (NUM_NODES, INPUT_DIM), jnp.float32)

    out = jax.block_until_ready(pixel_gat_forward(x, params, mask_bias))
    ref = jax.block_until_ready(pixel_gat_ref(x, params, adj_dense, pool_mat))

    assert out.shape == (NUM_GRAPHS, OUTPUT_DIM), out.shape
    # Tolerance deliberately loosened (1e-4 -> 2e-3): the kernel uses the EUP approx
    # reciprocal for softmax normalisation (perf-review item). Set approx=False in
    # _gat_layer to recover 1e-4 agreement.
    np.testing.assert_allclose(np.asarray(out), np.asarray(ref), rtol=2e-3, atol=2e-3)
    print("KERNEL_OK")
</pallas_src>

<mosaic_0001>
module attributes {stable_mosaic.version = 11 : i64} {
  func.func @_fused_pixel_gat_kernel(%arg0: i32, %arg1: memref<16x4xf32, #tpu.memory_space<vmem>>, %arg2: memref<16x16xf32, #tpu.memory_space<vmem>>, %arg3: memref<4x18xf32, #tpu.memory_space<vmem>>, %arg4: memref<2x4xf32, #tpu.memory_space<vmem>>, %arg5: memref<1x16xf32, #tpu.memory_space<vmem>>, %arg6: memref<16x18xf32, #tpu.memory_space<vmem>>, %arg7: memref<2x16xf32, #tpu.memory_space<vmem>>, %arg8: memref<1x16xf32, #tpu.memory_space<vmem>>, %arg9: memref<16x18xf32, #tpu.memory_space<vmem>>, %arg10: memref<2x16xf32, #tpu.memory_space<vmem>>, %arg11: memref<1x8xf32, #tpu.memory_space<vmem>>, %arg12: memref<8x8xf32, #tpu.memory_space<vmem>>, %arg13: memref<1x8xf32, #tpu.memory_space<vmem>>, %arg14: memref<8x4xf32, #tpu.memory_space<vmem>>, %arg15: memref<1x4xf32, #tpu.memory_space<vmem>>, %arg16: memref<1x1x4xf32, #tpu.memory_space<vmem>>) attributes {dimension_semantics = [#tpu.dimension_semantics<parallel>], iteration_bounds = array<i64: 2>, scalar_prefetch = 0 : i64, scratch_operands = 0 : i64, tpu.core_type = #tpu.core_type<tc>, window_params = [{transform_indices = @transform_0, window_bounds = array<i64: 16, 4>}, {pipeline_mode = #tpu.pipeline_mode<synchronous>, transform_indices = @transform_1, window_bounds = array<i64: 16, 16>}, {pipeline_mode = #tpu.pipeline_mode<synchronous>, transform_indices = @transform_2, window_bounds = array<i64: 4, 18>}, {pipeline_mode = #tpu.pipeline_mode<synchronous>, transform_indices = @transform_3, window_bounds = array<i64: 2, 4>}, {pipeline_mode = #tpu.pipeline_mode<synchronous>, transform_indices = @transform_4, window_bounds = array<i64: 1, 16>}, {pipeline_mode = #tpu.pipeline_mode<synchronous>, transform_indices = @transform_5, window_bounds = array<i64: 16, 18>}, {pipeline_mode = #tpu.pipeline_mode<synchronous>, transform_indices = @transform_6, window_bounds = array<i64: 2, 16>}, {pipeline_mode = #tpu.pipeline_mode<synchronous>, transform_indices = @transform_7, window_bounds = array<i64: 1, 16>}, {pipeline_mode = #tpu.pipeline_mode<synchronous>, transform_indices = @transform_8, window_bounds = array<i64: 16, 18>}, {pipeline_mode = #tpu.pipeline_mode<synchronous>, transform_indices = @transform_9, window_bounds = array<i64: 2, 16>}, {pipeline_mode = #tpu.pipeline_mode<synchronous>, transform_indices = @transform_10, window_bounds = array<i64: 1, 8>}, {pipeline_mode = #tpu.pipeline_mode<synchronous>, transform_indices = @transform_11, window_bounds = array<i64: 8, 8>}, {pipeline_mode = #tpu.pipeline_mode<synchronous>, transform_indices = @transform_12, window_bounds = array<i64: 1, 8>}, {pipeline_mode = #tpu.pipeline_mode<synchronous>, transform_indices = @transform_13, window_bounds = array<i64: 8, 4>}, {pipeline_mode = #tpu.pipeline_mode<synchronous>, transform_indices = @transform_14, window_bounds = array<i64: 1, 4>}, {transform_indices = @transform_15, window_bounds = array<i64: 1, 1, 4>}]} {
    %c0 = arith.constant 0 : index
    %c0_0 = arith.constant 0 : index
    %0 = vector.load %arg2[%c0, %c0_0] : memref<16x16xf32, #tpu.memory_space<vmem>>, vector<16x16xf32>
    %c0_1 = arith.constant 0 : index
    %c0_2 = arith.constant 0 : index
    %1 = vector.load %arg1[%c0_1, %c0_2] : memref<16x4xf32, #tpu.memory_space<vmem>>, vector<16x4xf32>
    %c0_3 = arith.constant 0 : index
    %c0_4 = arith.constant 0 : index
    %2 = vector.load %arg3[%c0_3, %c0_4] : memref<4x18xf32, #tpu.memory_space<vmem>>, vector<4x18xf32>
    %c0_5 = arith.constant 0 : index
    %c0_6 = arith.constant 0 : index
    %3 = vector.load %arg4[%c0_5, %c0_6] : memref<2x4xf32, #tpu.memory_space<vmem>>, vector<2x4xf32>
    %c0_7 = arith.constant 0 : index
    %c0_8 = arith.constant 0 : index
    %4 = vector.load %arg5[%c0_7, %c0_8] : memref<1x16xf32, #tpu.memory_space<vmem>>, vector<1x16xf32>
    %cst = arith.constant dense<0.000000e+00> : vector<16x18xf32>
    %5 = tpu.matmul %1, %2, %cst {dimension_numbers = #tpu.dot_dimension_numbers<[1], [0], [0], [1], [0, 0, 1, 1], [], []>} : vector<16x4xf32>, vector<4x18xf32>, vector<16x18xf32> -> vector<16x18xf32>
    %6 = vector.extract_strided_slice %5 {offsets = [0, 0], sizes = [16, 16], strides = [1, 1]} : vector<16x18xf32> to vector<16x16xf32>
    %7 = vector.extract_strided_slice %5 {offsets = [0, 16], sizes = [16, 2], strides = [1, 1]} : vector<16x18xf32> to vector<16x2xf32>
    %cst_9 = arith.constant dense<0.000000e+00> : vector<2x16xf32>
    %8 = tpu.matmul %3, %1, %cst_9 {dimension_numbers = #tpu.dot_dimension_numbers<[1], [1], [0], [0], [0, 0, 1, 0], [], []>} : vector<2x4xf32>, vector<16x4xf32>, vector<2x16xf32> -> vector<2x16xf32>
    %9 = vector.extract_strided_slice %7 {offsets = [0, 0], sizes = [16, 1], strides = [1, 1]} : vector<16x2xf32> to vector<16x1xf32>
    %10 = vector.extract_strided_slice %8 {offsets = [0, 0], sizes = [1, 16], strides = [1, 1]} : vector<2x16xf32> to vector<1x16xf32>
    %11 = vector.broadcast %9 : vector<16x1xf32> to vector<16x16xf32>
    %12 = vector.broadcast %10 : vector<1x16xf32> to vector<16x16xf32>
    %13 = arith.addf %11, %12 : vector<16x16xf32>
    %cst_10 = arith.constant 0.000000e+00 : f32
    %14 = vector.broadcast %cst_10 : f32 to vector<16x16xf32>
    %15 = arith.cmpf ogt, %13, %14 : vector<16x16xf32>
    %cst_11 = arith.constant 2.000000e-01 : f32
    %16 = vector.broadcast %cst_11 : f32 to vector<16x16xf32>
    %17 = arith.mulf %16, %13 : vector<16x16xf32>
    %18 = arith.select %15, %13, %17 : vector<16x16xi1>, vector<16x16xf32>
    %19 = arith.addf %18, %0 : vector<16x16xf32>
    %cst_12 = arith.constant dense<0xFF800000> : vector<16xf32>
    %20 = vector.multi_reduction <maximumf>, %19, %cst_12 [1] : vector<16x16xf32> to vector<16xf32>
    %21 = vector.shape_cast %20 : vector<16xf32> to vector<16x1xf32>
    %22 = vector.broadcast %21 : vector<16x1xf32> to vector<16x16xf32>
    %23 = arith.subf %19, %22 : vector<16x16xf32>
    %24 = math.exp %23 : vector<16x16xf32>
    %cst_13 = arith.constant dense<0.000000e+00> : vector<16xf32>
    %25 = vector.multi_reduction <add>, %24, %cst_13 [1] : vector<16x16xf32> to vector<16xf32>
    %26 = vector.shape_cast %25 : vector<16xf32> to vector<16x1xf32>
    %27 = vector.extract_strided_slice %6 {offsets = [0, 0], sizes = [16, 8], strides = [1, 1]} : vector<16x16xf32> to vector<16x8xf32>
    %cst_14 = arith.constant dense<0.000000e+00> : vector<16x8xf32>
    %28 = tpu.matmul %24, %27, %cst_14 {dimension_numbers = #tpu.dot_dimension_numbers<[1], [0], [0], [1], [0, 0, 1, 1], [], []>} : vector<16x16xf32>, vector<16x8xf32>, vector<16x8xf32> -> vector<16x8xf32>
    %29 = tpu.reciprocal %26 {approx = true} : vector<16x1xf32> -> vector<16x1xf32>
    %30 = vector.broadcast %29 : vector<16x1xf32> to vector<16x8xf32>
    %31 = arith.mulf %28, %30 : vector<16x8xf32>
    %32 = vector.extract_strided_slice %7 {offsets = [0, 1], sizes = [16, 1], strides = [1, 1]} : vector<16x2xf32> to vector<16x1xf32>
    %33 = vector.extract_strided_slice %8 {offsets = [1, 0], sizes = [1, 16], strides = [1, 1]} : vector<2x16xf32> to vector<1x16xf32>
    %34 = vector.broadcast %32 : vector<16x1xf32> to vector<16x16xf32>
    %35 = vector.broadcast %33 : vector<1x16xf32> to vector<16x16xf32>
    %36 = arith.addf %34, %35 : vector<16x16xf32>
    %cst_15 = arith.constant 0.000000e+00 : f32
    %37 = vector.broadcast %cst_15 : f32 to vector<16x16xf32>
    %38 = arith.cmpf ogt, %36, %37 : vector<16x16xf32>
    %cst_16 = arith.constant 2.000000e-01 : f32
    %39 = vector.broadcast %cst_16 : f32 to vector<16x16xf32>
    %40 = arith.mulf %39, %36 : vector<16x16xf32>
    %41 = arith.select %38, %36, %40 : vector<16x16xi1>, vector<16x16xf32>
    %42 = arith.addf %41, %0 : vector<16x16xf32>
    %cst_17 = arith.constant dense<0xFF800000> : vector<16xf32>
    %43 = vector.multi_reduction <maximumf>, %42, %cst_17 [1] : vector<16x16xf32> to vector<16xf32>
    %44 = vector.shape_cast %43 : vector<16xf32> to vector<16x1xf32>
    %45 = vector.broadcast %44 : vector<16x1xf32> to vector<16x16xf32>
    %46 = arith.subf %42, %45 : vector<16x16xf32>
    %47 = math.exp %46 : vector<16x16xf32>
    %cst_18 = arith.constant dense<0.000000e+00> : vector<16xf32>
    %48 = vector.multi_reduction <add>, %47, %cst_18 [1] : vector<16x16xf32> to vector<16xf32>
    %49 = vector.shape_cast %48 : vector<16xf32> to vector<16x1xf32>
    %50 = vector.extract_strided_slice %6 {offsets = [0, 8], sizes = [16, 8], strides = [1, 1]} : vector<16x16xf32> to vector<16x8xf32>
    %cst_19 = arith.constant dense<0.000000e+00> : vector<16x8xf32>
    %51 = tpu.matmul %47, %50, %cst_19 {dimension_numbers = #tpu.dot_dimension_numbers<[1], [0], [0], [1], [0, 0, 1, 1], [], []>} : vector<16x16xf32>, vector<16x8xf32>, vector<16x8xf32> -> vector<16x8xf32>
    %52 = tpu.reciprocal %49 {approx = true} : vector<16x1xf32> -> vector<16x1xf32>
    %53 = vector.broadcast %52 : vector<16x1xf32> to vector<16x8xf32>
    %54 = arith.mulf %51, %53 : vector<16x8xf32>
    %55 = tpu.concatenate %31, %54 in 1 : vector<16x8xf32>, vector<16x8xf32> -> vector<16x16xf32>
    %56 = vector.broadcast %4 : vector<1x16xf32> to vector<16x16xf32>
    %57 = arith.addf %55, %56 : vector<16x16xf32>
    %cst_20 = arith.constant 0.000000e+00 : f32
    %58 = vector.broadcast %cst_20 : f32 to vector<16x16xf32>
    %59 = arith.cmpf ogt, %57, %58 : vector<16x16xf32>
    %60 = math.exp %57 : vector<16x16xf32>
    %cst_21 = arith.constant 1.000000e+00 : f32
    %61 = vector.broadcast %cst_21 : f32 to vector<16x16xf32>
    %62 = arith.subf %60, %61 : vector<16x16xf32>
    %63 = arith.select %59, %57, %62 : vector<16x16xi1>, vector<16x16xf32>
    %c0_22 = arith.constant 0 : index
    %c0_23 = arith.constant 0 : index
    %64 = vector.load %arg6[%c0_22, %c0_23] : memref<16x18xf32, #tpu.memory_space<vmem>>, vector<16x18xf32>
    %c0_24 = arith.constant 0 : index
    %c0_25 = arith.constant 0 : index
    %65 = vector.load %arg7[%c0_24, %c0_25] : memref<2x16xf32, #tpu.memory_space<vmem>>, vector<2x16xf32>
    %c0_26 = arith.constant 0 : index
    %c0_27 = arith.constant 0 : index
    %66 = vector.load %arg8[%c0_26, %c0_27] : memref<1x16xf32, #tpu.memory_space<vmem>>, vector<1x16xf32>
    %cst_28 = arith.constant dense<0.000000e+00> : vector<16x18xf32>
    %67 = tpu.matmul %63, %64, %cst_28 {dimension_numbers = #tpu.dot_dimension_numbers<[1], [0], [0], [1], [0, 0, 1, 1], [], []>} : vector<16x16xf32>, vector<16x18xf32>, vector<16x18xf32> -> vector<16x18xf32>
    %68 = vector.extract_strided_slice %67 {offsets = [0, 0], sizes = [16, 16], strides = [1, 1]} : vector<16x18xf32> to vector<16x16xf32>
    %69 = vector.extract_strided_slice %67 {offsets = [0, 16], sizes = [16, 2], strides = [1, 1]} : vector<16x18xf32> to vector<16x2xf32>
    %cst_29 = arith.constant dense<0.000000e+00> : vector<2x16xf32>
    %70 = tpu.matmul %65, %63, %cst_29 {dimension_numbers = #tpu.dot_dimension_numbers<[1], [1], [0], [0], [0, 0, 1, 0], [], []>} : vector<2x16xf32>, vector<16x16xf32>, vector<2x16xf32> -> vector<2x16xf32>
    %71 = vector.extract_strided_slice %69 {offsets = [0, 0], sizes = [16, 1], strides = [1, 1]} : vector<16x2xf32> to vector<16x1xf32>
    %72 = vector.extract_strided_slice %70 {offsets = [0, 0], sizes = [1, 16], strides = [1, 1]} : vector<2x16xf32> to vector<1x16xf32>
    %73 = vector.broadcast %71 : vector<16x1xf32> to vector<16x16xf32>
    %74 = vector.broadcast %72 : vector<1x16xf32> to vector<16x16xf32>
    %75 = arith.addf %73, %74 : vector<16x16xf32>
    %cst_30 = arith.constant 0.000000e+00 : f32
    %76 = vector.broadcast %cst_30 : f32 to vector<16x16xf32>
    %77 = arith.cmpf ogt, %75, %76 : vector<16x16xf32>
    %cst_31 = arith.constant 2.000000e-01 : f32
    %78 = vector.broadcast %cst_31 : f32 to vector<16x16xf32>
    %79 = arith.mulf %78, %75 : vector<16x16xf32>
    %80 = arith.select %77, %75, %79 : vector<16x16xi1>, vector<16x16xf32>
    %81 = arith.addf %80, %0 : vector<16x16xf32>
    %cst_32 = arith.constant dense<0xFF800000> : vector<16xf32>
    %82 = vector.multi_reduction <maximumf>, %81, %cst_32 [1] : vector<16x16xf32> to vector<16xf32>
    %83 = vector.shape_cast %82 : vector<16xf32> to vector<16x1xf32>
    %84 = vector.broadcast %83 : vector<16x1xf32> to vector<16x16xf32>
    %85 = arith.subf %81, %84 : vector<16x16xf32>
    %86 = math.exp %85 : vector<16x16xf32>
    %cst_33 = arith.constant dense<0.000000e+00> : vector<16xf32>
    %87 = vector.multi_reduction <add>, %86, %cst_33 [1] : vector<16x16xf32> to vector<16xf32>
    %88 = vector.shape_cast %87 : vector<16xf32> to vector<16x1xf32>
    %89 = vector.extract_strided_slice %68 {offsets = [0, 0], sizes = [16, 8], strides = [1, 1]} : vector<16x16xf32> to vector<16x8xf32>
    %cst_34 = arith.constant dense<0.000000e+00> : vector<16x8xf32>
    %90 = tpu.matmul %86, %89, %cst_34 {dimension_numbers = #tpu.dot_dimension_numbers<[1], [0], [0], [1], [0, 0, 1, 1], [], []>} : vector<16x16xf32>, vector<16x8xf32>, vector<16x8xf32> -> vector<16x8xf32>
    %91 = tpu.reciprocal %88 {approx = true} : vector<16x1xf32> -> vector<16x1xf32>
    %92 = vector.broadcast %91 : vector<16x1xf32> to vector<16x8xf32>
    %93 = arith.mulf %90, %92 : vector<16x8xf32>
    %94 = vector.extract_strided_slice %69 {offsets = [0, 1], sizes = [16, 1], strides = [1, 1]} : vector<16x2xf32> to vector<16x1xf32>
    %95 = vector.extract_strided_slice %70 {offsets = [1, 0], sizes = [1, 16], strides = [1, 1]} : vector<2x16xf32> to vector<1x16xf32>
    %96 = vector.broadcast %94 : vector<16x1xf32> to vector<16x16xf32>
    %97 = vector.broadcast %95 : vector<1x16xf32> to vector<16x16xf32>
    %98 = arith.addf %96, %97 : vector<16x16xf32>
    %cst_35 = arith.constant 0.000000e+00 : f32
    %99 = vector.broadcast %cst_35 : f32 to vector<16x16xf32>
    %100 = arith.cmpf ogt, %98, %99 : vector<16x16xf32>
    %cst_36 = arith.constant 2.000000e-01 : f32
    %101 = vector.broadcast %cst_36 : f32 to vector<16x16xf32>
    %102 = arith.mulf %101, %98 : vector<16x16xf32>
    %103 = arith.select %100, %98, %102 : vector<16x16xi1>, vector<16x16xf32>
    %104 = arith.addf %103, %0 : vector<16x16xf32>
    %cst_37 = arith.constant dense<0xFF800000> : vector<16xf32>
    %105 = vector.multi_reduction <maximumf>, %104, %cst_37 [1] : vector<16x16xf32> to vector<16xf32>
    %106 = vector.shape_cast %105 : vector<16xf32> to vector<16x1xf32>
    %107 = vector.broadcast %106 : vector<16x1xf32> to vector<16x16xf32>
    %108 = arith.subf %104, %107 : vector<16x16xf32>
    %109 = math.exp %108 : vector<16x16xf32>
    %cst_38 = arith.constant dense<0.000000e+00> : vector<16xf32>
    %110 = vector.multi_reduction <add>, %109, %cst_38 [1] : vector<16x16xf32> to vector<16xf32>
    %111 = vector.shape_cast %110 : vector<16xf32> to vector<16x1xf32>
    %112 = vector.extract_strided_slice %68 {offsets = [0, 8], sizes = [16, 8], strides = [1, 1]} : vector<16x16xf32> to vector<16x8xf32>
    %cst_39 = arith.constant dense<0.000000e+00> : vector<16x8xf32>
    %113 = tpu.matmul %109, %112, %cst_39 {dimension_numbers = #tpu.dot_dimension_numbers<[1], [0], [0], [1], [0, 0, 1, 1], [], []>} : vector<16x16xf32>, vector<16x8xf32>, vector<16x8xf32> -> vector<16x8xf32>
    %114 = tpu.reciprocal %111 {approx = true} : vector<16x1xf32> -> vector<16x1xf32>
    %115 = vector.broadcast %114 : vector<16x1xf32> to vector<16x8xf32>
    %116 = arith.mulf %113, %115 : vector<16x8xf32>
    %117 = tpu.concatenate %93, %116 in 1 : vector<16x8xf32>, vector<16x8xf32> -> vector<16x16xf32>
    %118 = vector.broadcast %66 : vector<1x16xf32> to vector<16x16xf32>
    %119 = arith.addf %117, %118 : vector<16x16xf32>
    %cst_40 = arith.constant 0.000000e+00 : f32
    %120 = vector.broadcast %cst_40 : f32 to vector<16x16xf32>
    %121 = arith.cmpf ogt, %119, %120 : vector<16x16xf32>
    %122 = math.exp %119 : vector<16x16xf32>
    %cst_41 = arith.constant 1.000000e+00 : f32
    %123 = vector.broadcast %cst_41 : f32 to vector<16x16xf32>
    %124 = arith.subf %122, %123 : vector<16x16xf32>
    %125 = arith.select %121, %119, %124 : vector<16x16xi1>, vector<16x16xf32>
    %c0_42 = arith.constant 0 : index
    %c0_43 = arith.constant 0 : index
    %126 = vector.load %arg9[%c0_42, %c0_43] : memref<16x18xf32, #tpu.memory_space<vmem>>, vector<16x18xf32>
    %c0_44 = arith.constant 0 : index
    %c0_45 = arith.constant 0 : index
    %127 = vector.load %arg10[%c0_44, %c0_45] : memref<2x16xf32, #tpu.memory_space<vmem>>, vector<2x16xf32>
    %c0_46 = arith.constant 0 : index
    %c0_47 = arith.constant 0 : index
    %128 = vector.load %arg11[%c0_46, %c0_47] : memref<1x8xf32, #tpu.memory_space<vmem>>, vector<1x8xf32>
    %cst_48 = arith.constant dense<0.000000e+00> : vector<16x18xf32>
    %129 = tpu.matmul %125, %126, %cst_48 {dimension_numbers = #tpu.dot_dimension_numbers<[1], [0], [0], [1], [0, 0, 1, 1], [], []>} : vector<16x16xf32>, vector<16x18xf32>, vector<16x18xf32> -> vector<16x18xf32>
    %130 = vector.extract_strided_slice %129 {offsets = [0, 0], sizes = [16, 16], strides = [1, 1]} : vector<16x18xf32> to vector<16x16xf32>
    %131 = vector.extract_strided_slice %129 {offsets = [0, 16], sizes = [16, 2], strides = [1, 1]} : vector<16x18xf32> to vector<16x2xf32>
    %cst_49 = arith.constant dense<0.000000e+00> : vector<2x16xf32>
    %132 = tpu.matmul %127, %125, %cst_49 {dimension_numbers = #tpu.dot_dimension_numbers<[1], [1], [0], [0], [0, 0, 1, 0], [], []>} : vector<2x16xf32>, vector<16x16xf32>, vector<2x16xf32> -> vector<2x16xf32>
    %133 = vector.extract_strided_slice %131 {offsets = [0, 0], sizes = [16, 1], strides = [1, 1]} : vector<16x2xf32> to vector<16x1xf32>
    %134 = vector.extract_strided_slice %132 {offsets = [0, 0], sizes = [1, 16], strides = [1, 1]} : vector<2x16xf32> to vector<1x16xf32>
    %135 = vector.broadcast %133 : vector<16x1xf32> to vector<16x16xf32>
    %136 = vector.broadcast %134 : vector<1x16xf32> to vector<16x16xf32>
    %137 = arith.addf %135, %136 : vector<16x16xf32>
    %cst_50 = arith.constant 0.000000e+00 : f32
    %138 = vector.broadcast %cst_50 : f32 to vector<16x16xf32>
    %139 = arith.cmpf ogt, %137, %138 : vector<16x16xf32>
    %cst_51 = arith.constant 2.000000e-01 : f32
    %140 = vector.broadcast %cst_51 : f32 to vector<16x16xf32>
    %141 = arith.mulf %140, %137 : vector<16x16xf32>
    %142 = arith.select %139, %137, %141 : vector<16x16xi1>, vector<16x16xf32>
    %143 = arith.addf %142, %0 : vector<16x16xf32>
    %cst_52 = arith.constant dense<0xFF800000> : vector<16xf32>
    %144 = vector.multi_reduction <maximumf>, %143, %cst_52 [1] : vector<16x16xf32> to vector<16xf32>
    %145 = vector.shape_cast %144 : vector<16xf32> to vector<16x1xf32>
    %146 = vector.broadcast %145 : vector<16x1xf32> to vector<16x16xf32>
    %147 = arith.subf %143, %146 : vector<16x16xf32>
    %148 = math.exp %147 : vector<16x16xf32>
    %cst_53 = arith.constant dense<0.000000e+00> : vector<16xf32>
    %149 = vector.multi_reduction <add>, %148, %cst_53 [1] : vector<16x16xf32> to vector<16xf32>
    %150 = vector.shape_cast %149 : vector<16xf32> to vector<16x1xf32>
    %151 = vector.extract_strided_slice %130 {offsets = [0, 0], sizes = [16, 8], strides = [1, 1]} : vector<16x16xf32> to vector<16x8xf32>
    %cst_54 = arith.constant dense<0.000000e+00> : vector<16x8xf32>
    %152 = tpu.matmul %148, %151, %cst_54 {dimension_numbers = #tpu.dot_dimension_numbers<[1], [0], [0], [1], [0, 0, 1, 1], [], []>} : vector<16x16xf32>, vector<16x8xf32>, vector<16x8xf32> -> vector<16x8xf32>
    %153 = tpu.reciprocal %150 {approx = true} : vector<16x1xf32> -> vector<16x1xf32>
    %154 = vector.broadcast %153 : vector<16x1xf32> to vector<16x8xf32>
    %155 = arith.mulf %152, %154 : vector<16x8xf32>
    %156 = vector.extract_strided_slice %131 {offsets = [0, 1], sizes = [16, 1], strides = [1, 1]} : vector<16x2xf32> to vector<16x1xf32>
    %157 = vector.extract_strided_slice %132 {offsets = [1, 0], sizes = [1, 16], strides = [1, 1]} : vector<2x16xf32> to vector<1x16xf32>
    %158 = vector.broadcast %156 : vector<16x1xf32> to vector<16x16xf32>
    %159 = vector.broadcast %157 : vector<1x16xf32> to vector<16x16xf32>
    %160 = arith.addf %158, %159 : vector<16x16xf32>
    %cst_55 = arith.constant 0.000000e+00 : f32
    %161 = vector.broadcast %cst_55 : f32 to vector<16x16xf32>
    %162 = arith.cmpf ogt, %160, %161 : vector<16x16xf32>
    %cst_56 = arith.constant 2.000000e-01 : f32
    %163 = vector.broadcast %cst_56 : f32 to vector<16x16xf32>
    %164 = arith.mulf %163, %160 : vector<16x16xf32>
    %165 = arith.select %162, %160, %164 : vector<16x16xi1>, vector<16x16xf32>
    %166 = arith.addf %165, %0 : vector<16x16xf32>
    %cst_57 = arith.constant dense<0xFF800000> : vector<16xf32>
    %167 = vector.multi_reduction <maximumf>, %166, %cst_57 [1] : vector<16x16xf32> to vector<16xf32>
    %168 = vector.shape_cast %167 : vector<16xf32> to vector<16x1xf32>
    %169 = vector.broadcast %168 : vector<16x1xf32> to vector<16x16xf32>
    %170 = arith.subf %166, %169 : vector<16x16xf32>
    %171 = math.exp %170 : vector<16x16xf32>
    %cst_58 = arith.constant dense<0.000000e+00> : vector<16xf32>
    %172 = vector.multi_reduction <add>, %171, %cst_58 [1] : vector<16x16xf32> to vector<16xf32>
    %173 = vector.shape_cast %172 : vector<16xf32> to vector<16x1xf32>
    %174 = vector.extract_strided_slice %130 {offsets = [0, 8], sizes = [16, 8], strides = [1, 1]} : vector<16x16xf32> to vector<16x8xf32>
    %cst_59 = arith.constant dense<0.000000e+00> : vector<16x8xf32>
    %175 = tpu.matmul %171, %174, %cst_59 {dimension_numbers = #tpu.dot_dimension_numbers<[1], [0], [0], [1], [0, 0, 1, 1], [], []>} : vector<16x16xf32>, vector<16x8xf32>, vector<16x8xf32> -> vector<16x8xf32>
    %176 = tpu.reciprocal %173 {approx = true} : vector<16x1xf32> -> vector<16x1xf32>
    %177 = vector.broadcast %176 : vector<16x1xf32> to vector<16x8xf32>
    %178 = arith.mulf %175, %177 : vector<16x8xf32>
    %179 = arith.addf %155, %178 : vector<16x8xf32>
    %cst_60 = arith.constant 5.000000e-01 : f32
    %180 = vector.broadcast %cst_60 : f32 to vector<16x8xf32>
    %181 = arith.mulf %179, %180 : vector<16x8xf32>
    %182 = vector.broadcast %128 : vector<1x8xf32> to vector<16x8xf32>
    %183 = arith.addf %181, %182 : vector<16x8xf32>
    %cst_61 = arith.constant 6.250000e-02 : f32
    %184 = vector.broadcast %cst_61 : f32 to vector<1x16xf32>
    %cst_62 = arith.constant dense<0.000000e+00> : vector<1x8xf32>
    %185 = tpu.matmul %184, %183, %cst_62 {dimension_numbers = #tpu.dot_dimension_numbers<[1], [0], [0], [1], [0, 0, 1, 1], [], []>} : vector<1x16xf32>, vector<16x8xf32>, vector<1x8xf32> -> vector<1x8xf32>
    %c0_63 = arith.constant 0 : index
    %c0_64 = arith.constant 0 : index
    %186 = vector.load %arg12[%c0_63, %c0_64] : memref<8x8xf32, #tpu.memory_space<vmem>>, vector<8x8xf32>
    %cst_65 = arith.constant dense<0.000000e+00> : vector<1x8xf32>
    %187 = tpu.matmul %185, %186, %cst_65 {dimension_numbers = #tpu.dot_dimension_numbers<[1], [0], [0], [1], [0, 0, 1, 1], [], []>} : vector<1x8xf32>, vector<8x8xf32>, vector<1x8xf32> -> vector<1x8xf32>
    %c0_66 = arith.constant 0 : index
    %c0_67 = arith.constant 0 : index
    %188 = vector.load %arg13[%c0_66, %c0_67] : memref<1x8xf32, #tpu.memory_space<vmem>>, vector<1x8xf32>
    %189 = arith.addf %187, %188 : vector<1x8xf32>
    %cst_68 = arith.constant 0.000000e+00 : f32
    %190 = vector.broadcast %cst_68 : f32 to vector<1x8xf32>
    %191 = arith.maximumf %189, %190 : vector<1x8xf32>
    %c0_69 = arith.constant 0 : index
    %c0_70 = arith.constant 0 : index
    %192 = vector.load %arg14[%c0_69, %c0_70] : memref<8x4xf32, #tpu.memory_space<vmem>>, vector<8x4xf32>
    %cst_71 = arith.constant dense<0.000000e+00> : vector<1x4xf32>
    %193 = tpu.matmul %191, %192, %cst_71 {dimension_numbers = #tpu.dot_dimension_numbers<[1], [0], [0], [1], [0, 0, 1, 1], [], []>} : vector<1x8xf32>, vector<8x4xf32>, vector<1x4xf32> -> vector<1x4xf32>
    %c0_72 = arith.constant 0 : index
    %c0_73 = arith.constant 0 : index
    %194 = vector.load %arg15[%c0_72, %c0_73] : memref<1x4xf32, #tpu.memory_space<vmem>>, vector<1x4xf32>
    %195 = arith.addf %193, %194 : vector<1x4xf32>
    %196 = vector.shape_cast %195 : vector<1x4xf32> to vector<1x1x4xf32>
    %c0_74 = arith.constant 0 : index
    %c0_75 = arith.constant 0 : index
    %c0_76 = arith.constant 0 : index
    %197 = vector.load %arg16[%c0_74, %c0_75, %c0_76] : memref<1x1x4xf32, #tpu.memory_space<vmem>>, vector<1x1x4xf32>
    tpu.vector_store %arg16[%c0_74, %c0_75, %c0_76], %196 {strides = array<i32>} : memref<1x1x4xf32, #tpu.memory_space<vmem>>, vector<1x1x4xf32>,
    return
  }
  func.func @transform_0(%arg0: i32) -> (i32, i32) {
    %c0_i32 = arith.constant 0 : i32
    %c0_i32_0 = arith.constant 0 : i32
    return %arg0, %c0_i32 : i32, i32
  }
  func.func @transform_1(%arg0: i32) -> (i32, i32) {
    %c0_i32 = arith.constant 0 : i32
    %c0_i32_0 = arith.constant 0 : i32
    %c0_i32_1 = arith.constant 0 : i32
    return %c0_i32, %c0_i32_0 : i32, i32
  }
  func.func @transform_2(%arg0: i32) -> (i32, i32) {
    %c0_i32 = arith.constant 0 : i32
    %c0_i32_0 = arith.constant 0 : i32
    %c0_i32_1 = arith.constant 0 : i32
    return %c0_i32, %c0_i32_0 : i32, i32
  }
  func.func @transform_3(%arg0: i32) -> (i32, i32) {
    %c0_i32 = arith.constant 0 : i32
    %c0_i32_0 = arith.constant 0 : i32
    %c0_i32_1 = arith.constant 0 : i32
    return %c0_i32, %c0_i32_0 : i32, i32
  }
  func.func @transform_4(%arg0: i32) -> (i32, i32) {
    %c0_i32 = arith.constant 0 : i32
    %c0_i32_0 = arith.constant 0 : i32
    %c0_i32_1 = arith.constant 0 : i32
    return %c0_i32, %c0_i32_0 : i32, i32
  }
  func.func @transform_5(%arg0: i32) -> (i32, i32) {
    %c0_i32 = arith.constant 0 : i32
    %c0_i32_0 = arith.constant 0 : i32
    %c0_i32_1 = arith.constant 0 : i32
    return %c0_i32, %c0_i32_0 : i32, i32
  }
  func.func @transform_6(%arg0: i32) -> (i32, i32) {
    %c0_i32 = arith.constant 0 : i32
    %c0_i32_0 = arith.constant 0 : i32
    %c0_i32_1 = arith.constant 0 : i32
    return %c0_i32, %c0_i32_0 : i32, i32
  }
  func.func @transform_7(%arg0: i32) -> (i32, i32) {
    %c0_i32 = arith.constant 0 : i32
    %c0_i32_0 = arith.constant 0 : i32
    %c0_i32_1 = arith.constant 0 : i32
    return %c0_i32, %c0_i32_0 : i32, i32
  }
  func.func @transform_8(%arg0: i32) -> (i32, i32) {
    %c0_i32 = arith.constant 0 : i32
    %c0_i32_0 = arith.constant 0 : i32
    %c0_i32_1 = arith.constant 0 : i32
    return %c0_i32, %c0_i32_0 : i32, i32
  }
  func.func @transform_9(%arg0: i32) -> (i32, i32) {
    %c0_i32 = arith.constant 0 : i32
    %c0_i32_0 = arith.constant 0 : i32
    %c0_i32_1 = arith.constant 0 : i32
    return %c0_i32, %c0_i32_0 : i32, i32
  }
  func.func @transform_10(%arg0: i32) -> (i32, i32) {
    %c0_i32 = arith.constant 0 : i32
    %c0_i32_0 = arith.constant 0 : i32
    %c0_i32_1 = arith.constant 0 : i32
    return %c0_i32, %c0_i32_0 : i32, i32
  }
  func.func @transform_11(%arg0: i32) -> (i32, i32) {
    %c0_i32 = arith.constant 0 : i32
    %c0_i32_0 = arith.constant 0 : i32
    %c0_i32_1 = arith.constant 0 : i32
    return %c0_i32, %c0_i32_0 : i32, i32
  }
  func.func @transform_12(%arg0: i32) -> (i32, i32) {
    %c0_i32 = arith.constant 0 : i32
    %c0_i32_0 = arith.constant 0 : i32
    %c0_i32_1 = arith.constant 0 : i32
    return %c0_i32, %c0_i32_0 : i32, i32
  }
  func.func @transform_13(%arg0: i32) -> (i32, i32) {
    %c0_i32 = arith.constant 0 : i32
    %c0_i32_0 = arith.constant 0 : i32
    %c0_i32_1 = arith.constant 0 : i32
    return %c0_i32, %c0_i32_0 : i32, i32
  }
  func.func @transform_14(%arg0: i32) -> (i32, i32) {
    %c0_i32 = arith.constant 0 : i32
    %c0_i32_0 = arith.constant 0 : i32
    %c0_i32_1 = arith.constant 0 : i32
    return %c0_i32, %c0_i32_0 : i32, i32
  }
  func.func @transform_15(%arg0: i32) -> (i32, i32, i32) {
    %c0_i32 = arith.constant 0 : i32
    %c0_i32_0 = arith.constant 0 : i32
    %c0_i32_1 = arith.constant 0 : i32
    return %arg0, %c0_i32, %c0_i32_0 : i32, i32, i32
  }
}

</mosaic_0001>

<llo_original>
// kernel: tpu_custom_call.1
$region0: #{tpu_custom_call.1}
  #allocation0 [shape = 'u32[]', space=smem, size = 0x4, offset = 0x4, fixed_abs, tag = 'smem constant byte address 0x4 - core index']
  #allocation1 [shape = 'u32[144,128]{1,0:T(1,128)}', space=vmem, size = 0x12000, scoped, tag = 'internal scratch']
  %s0 = inlined_call_operand.vmem [shape: f32[32,4], index: 0, kind: input, shape index: {}]
  %s1 = inlined_call_operand.vmem [shape: f32[16,16], index: 1, kind: input, shape index: {}]
  %s2 = inlined_call_operand.hbm [shape: f32[4,18], index: 2, kind: input, shape index: {}]
  %s3 = inlined_call_operand.hbm [shape: f32[2,4], index: 3, kind: input, shape index: {}]
  %s4 = inlined_call_operand.hbm [shape: f32[1,16], index: 4, kind: input, shape index: {}]
  %s5 = inlined_call_operand.vmem [shape: f32[16,18], index: 5, kind: input, shape index: {}]
  %s6 = inlined_call_operand.hbm [shape: f32[2,16], index: 6, kind: input, shape index: {}]
  %s7 = inlined_call_operand.hbm [shape: f32[1,16], index: 7, kind: input, shape index: {}]
  %s8 = inlined_call_operand.vmem [shape: f32[16,18], index: 8, kind: input, shape index: {}]
  %s9 = inlined_call_operand.vmem [shape: f32[2,16], index: 9, kind: input, shape index: {}]
  %s10 = inlined_call_operand.vmem [shape: f32[1,8], index: 10, kind: input, shape index: {}]
  %s11 = inlined_call_operand.vmem [shape: f32[8,8], index: 11, kind: input, shape index: {}]
  %s12 = inlined_call_operand.vmem [shape: f32[1,8], index: 12, kind: input, shape index: {}]
  %s13 = inlined_call_operand.vmem [shape: f32[8,4], index: 13, kind: input, shape index: {}]
  %s14 = inlined_call_operand.vmem [shape: f32[1,4], index: 14, kind: input, shape index: {}]
  %s15 = inlined_call_operand.hbm [shape: f32[2,1,4], index: 15, kind: output, shape index: {}]
  %s16 = sld [smem:[#allocation0]]
  $region113: #{tpu_custom_call.1} parent=0
    _
  %s18 = ssub.s32 1, %s16
  %s19 = scalar_select 0, %s18, %s16
  $region1: #{tpu_custom_call.1} parent=0
    #allocation2 [shape = 'u8[2048]{0}', space=vmem, size = 0x800, scoped, tag = 'input window, operand 2, single buffered']
    #allocation3 [shape = 's32[2]{0}', space=sflag, size = 0x8, scoped, tag = 'scoped memory for tpu_custom_call.1']
    #allocation4 [shape = 's32[2]{0}', space=sflag, size = 0x8, scoped, tag = 'scoped memory for tpu_custom_call.1']
    #allocation5 [shape = 'u8[1024]{0}', space=vmem, size = 0x400, scoped, tag = 'input window, operand 3, single buffered']
    #allocation6 [shape = 's32[1]{0}', space=sflag, size = 0x4, scoped, tag = 'scoped memory for tpu_custom_call.1']
    #allocation7 [shape = 'u8[512]{0}', space=vmem, size = 0x400, scoped, tag = 'input window, operand 4, single buffered']
    #allocation8 [shape = 'u8[1024]{0}', space=vmem, size = 0x400, scoped, tag = 'input window, operand 6, single buffered']
    #allocation9 [shape = 's32[1]{0}', space=sflag, size = 0x4, scoped, tag = 'scoped memory for tpu_custom_call.1']
    #allocation10 [shape = 'u8[512]{0}', space=vmem, size = 0x400, scoped, tag = 'input window, operand 7, single buffered']
    #allocation11 [shape = 'u8[1024]{0}', space=vmem, size = 0x400, scoped, tag = 'output window, operand 0']
    %20 = vsyncpa [#allocation3], 0
    %21 = vsyncpa [#allocation6], 0
    %22 = vsyncpa [#allocation9], 0
    %23 = vsyncpa [#allocation4], 0
    %s24 = scalar_lea.sflag [#allocation4], 1
    %25 = vsyncpa %s24, 0
    loop: start=0, step=1, limit=4
    $region2: #{tpu_custom_call.1} parent=1 // loop_pre_header
      _
    $region3: #{tpu_custom_call.1} parent=1 // loop_header
      %s27 = sphi 0, %s31
      %p28 = scmp.ge.s32.totalorder %s27, 4
      %s37 = sphi 0, %s39
      %s40 = sphi 0, %s37
      %s41 = sphi 0, %s40
      %s57 = sphi 0, %s41
      %s61 = sphi 0, %s61
      %s63 = sphi 0, %s61
      %s64 = sphi 0, %s63
      %s78 = sphi 0, %s64
      %s82 = sphi 0, %s82
      %s84 = sphi 0, %s82
      %s85 = sphi 0, %s84
      %s99 = sphi 0, %s85
      %s103 = sphi 0, %s103
      %s105 = sphi 0, %s103
      %s106 = sphi 0, %s105
      %s120 = sphi 0, %s106
      %s124 = sphi 0, %s124
      %s126 = sphi 0, %s124
      %s127 = sphi 0, %s126
      %s141 = sphi 0, %s127
      %s145 = sphi 0, %s145
      %s147 = sphi 0, %s145
      %s148 = sphi 0, %s147
      %s162 = sphi 0, %s148
      %s166 = sphi 0, %s166
      %s168 = sphi 0, %s166
      %s169 = sphi 0, %s168
      %s183 = sphi 0, %s169
      %s187 = sphi 0, %s187
      %s189 = sphi 0, %s187
      %s190 = sphi 0, %s189
      %s204 = sphi 0, %s190
      %s208 = sphi 0, %s208
      %s210 = sphi 0, %s208
      %s211 = sphi 0, %s210
      %s225 = sphi 0, %s211
      %s229 = sphi 0, %s229
      %s231 = sphi 0, %s229
      %s232 = sphi 0, %s231
      %s246 = sphi 0, %s232
      %s250 = sphi 0, %s250
      %s252 = sphi 0, %s250
      %s253 = sphi 0, %s252
      %s267 = sphi 0, %s253
      %s271 = sphi 0, %s271
      %s273 = sphi 0, %s271
      %s274 = sphi 0, %s273
      %s288 = sphi 0, %s274
      %s292 = sphi 0, %s292
      %s294 = sphi 0, %s292
      %s295 = sphi 0, %s294
      %s309 = sphi 0, %s295
      %s313 = sphi 0, %s313
      %s315 = sphi 0, %s313
      %s316 = sphi 0, %s315
      %s330 = sphi 0, %s316
      %s334 = sphi 0, %s334
      %s336 = sphi 0, %s334
      %s337 = sphi 0, %s336
      %s351 = sphi 0, %s337
      %s357 = sphi 0, %s359
      %s360 = sphi 0, %s357
      %s361 = sphi 0, %s360
      %s377 = sphi 0, %s361
    $region4: #{tpu_custom_call.1} parent=1 // loop_header_branch
      %30 = sbr.rel (%p28) target = $region8
    $region5: #{tpu_custom_call.1} parent=1 // loop_body
      %s32 = ssub.s32 %s27, 1
      %s33 = ssub.s32 %s27, 2
      %s34 = sadd.s32 %s27, 1
      %s35 = ssub.s32 %s27, %s34
      %p36 = scmp.eq.s32.totalorder %s35, 0
      %s38 = sadd.s32 %s37, 1
      %s39 = scalar_select %p36, %s37, %s38
      %p42 = pneg %p36
      %p43 = scmp.eq.s32.totalorder %s27, 1
      %p44 = por %p42, %p43
      %p45 = scmp.ne.s32.totalorder %s37, %s40
      %p46 = scmp.eq.s32.totalorder %s27, 0
      %p47 = por %p45, %p46
      %p48 = scmp.ne.s32.totalorder %s37, %s40
      %p49 = scmp.eq.s32.totalorder %s32, 1
      %p50 = por %p48, %p49
      %p51 = scmp.ne.s32.totalorder %s40, %s41
      %p52 = scmp.eq.s32.totalorder %s32, 0
      %p53 = por %p51, %p52
      %p54 = scmp.ne.s32.totalorder %s40, %s41
      %p55 = scmp.eq.s32.totalorder %s33, 1
      %p56 = por %p54, %p55
      %p58 = scmp.ne.s32.totalorder %s41, %s57
      %p59 = scmp.eq.s32.totalorder %s33, 0
      %p60 = por %p58, %p59
      %s62 = sadd.s32 %s61, 1
      %p65 = scmp.eq.s32.totalorder %s27, 1
      %p66 = scmp.ne.s32.totalorder %s61, %s63
      %p67 = scmp.eq.s32.totalorder %s27, 0
      %p68 = por %p66, %p67
      %p69 = scmp.ne.s32.totalorder %s61, %s63
      %p70 = scmp.eq.s32.totalorder %s32, 1
      %p71 = por %p69, %p70
      %p72 = scmp.ne.s32.totalorder %s63, %s64
      %p73 = scmp.eq.s32.totalorder %s32, 0
      %p74 = por %p72, %p73
      %p75 = scmp.ne.s32.totalorder %s63, %s64
      %p76 = scmp.eq.s32.totalorder %s33, 1
      %p77 = por %p75, %p76
      %p79 = scmp.ne.s32.totalorder %s64, %s78
      %p80 = scmp.eq.s32.totalorder %s33, 0
      %p81 = por %p79, %p80
      %s83 = sadd.s32 %s82, 1
      %p86 = scmp.eq.s32.totalorder %s27, 1
      %p87 = scmp.ne.s32.totalorder %s82, %s84
      %p88 = scmp.eq.s32.totalorder %s27, 0
      %p89 = por %p87, %p88
      %p90 = scmp.ne.s32.totalorder %s82, %s84
      %p91 = scmp.eq.s32.totalorder %s32, 1
      %p92 = por %p90, %p91
      %p93 = scmp.ne.s32.totalorder %s84, %s85
      %p94 = scmp.eq.s32.totalorder %s32, 0
      %p95 = por %p93, %p94
      %p96 = scmp.ne.s32.totalorder %s84, %s85
      %p97 = scmp.eq.s32.totalorder %s33, 1
      %p98 = por %p96, %p97
      %p100 = scmp.ne.s32.totalorder %s85, %s99
      %p101 = scmp.eq.s32.totalorder %s33, 0
      %p102 = por %p100, %p101
      %s104 = sadd.s32 %s103, 1
      %p107 = scmp.eq.s32.totalorder %s27, 1
      %p108 = scmp.ne.s32.totalorder %s103, %s105
      %p109 = scmp.eq.s32.totalorder %s27, 0
      %p110 = por %p108, %p109
      %p111 = scmp.ne.s32.totalorder %s103, %s105
      %p112 = scmp.eq.s32.totalorder %s32, 1
      %p113 = por %p111, %p112
      %p114 = scmp.ne.s32.totalorder %s105, %s106
      %p115 = scmp.eq.s32.totalorder %s32, 0
      %p116 = por %p114, %p115
      %p117 = scmp.ne.s32.totalorder %s105, %s106
      %p118 = scmp.eq.s32.totalorder %s33, 1
      %p119 = por %p117, %p118
      %p121 = scmp.ne.s32.totalorder %s106, %s120
      %p122 = scmp.eq.s32.totalorder %s33, 0
      %p123 = por %p121, %p122
      %s125 = sadd.s32 %s124, 1
      %p128 = scmp.eq.s32.totalorder %s27, 1
      %p129 = scmp.ne.s32.totalorder %s124, %s126
      %p130 = scmp.eq.s32.totalorder %s27, 0
      %p131 = por %p129, %p130
      %p132 = scmp.ne.s32.totalorder %s124, %s126
      %p133 = scmp.eq.s32.totalorder %s32, 1
      %p134 = por %p132, %p133
      %p135 = scmp.ne.s32.totalorder %s126, %s127
      %p136 = scmp.eq.s32.totalorder %s32, 0
      %p137 = por %p135, %p136
      %p138 = scmp.ne.s32.totalorder %s126, %s127
      %p139 = scmp.eq.s32.totalorder %s33, 1
      %p140 = por %p138, %p139
      %p142 = scmp.ne.s32.totalorder %s127, %s141
      %p143 = scmp.eq.s32.totalorder %s33, 0
      %p144 = por %p142, %p143
      %s146 = sadd.s32 %s145, 1
      %p149 = scmp.eq.s32.totalorder %s27, 1
      %p150 = scmp.ne.s32.totalorder %s145, %s147
      %p151 = scmp.eq.s32.totalorder %s27, 0
      %p152 = por %p150, %p151
      %p153 = scmp.ne.s32.totalorder %s145, %s147
      %p154 = scmp.eq.s32.totalorder %s32, 1
      %p155 = por %p153, %p154
      %p156 = scmp.ne.s32.totalorder %s147, %s148
      %p157 = scmp.eq.s32.totalorder %s32, 0
      %p158 = por %p156, %p157
      %p159 = scmp.ne.s32.totalorder %s147, %s148
      %p160 = scmp.eq.s32.totalorder %s33, 1
      %p161 = por %p159, %p160
      %p163 = scmp.ne.s32.totalorder %s148, %s162
      %p164 = scmp.eq.s32.totalorder %s33, 0
      %p165 = por %p163, %p164
      %s167 = sadd.s32 %s166, 1
      %p170 = scmp.eq.s32.totalorder %s27, 1
      %p171 = scmp.ne.s32.totalorder %s166, %s168
      %p172 = scmp.eq.s32.totalorder %s27, 0
      %p173 = por %p171, %p172
      %p174 = scmp.ne.s32.totalorder %s166, %s168
      %p175 = scmp.eq.s32.totalorder %s32, 1
      %p176 = por %p174, %p175
      %p177 = scmp.ne.s32.totalorder %s168, %s169
      %p178 = scmp.eq.s32.totalorder %s32, 0
      %p179 = por %p177, %p178
      %p180 = scmp.ne.s32.totalorder %s168, %s169
      %p181 = scmp.eq.s32.totalorder %s33, 1
      %p182 = por %p180, %p181
      %p184 = scmp.ne.s32.totalorder %s169, %s183
      %p185 = scmp.eq.s32.totalorder %s33, 0
      %p186 = por %p184, %p185
      %s188 = sadd.s32 %s187, 1
      %p191 = scmp.eq.s32.totalorder %s27, 1
      %p192 = scmp.ne.s32.totalorder %s187, %s189
      %p193 = scmp.eq.s32.totalorder %s27, 0
      %p194 = por %p192, %p193
      %p195 = scmp.ne.s32.totalorder %s187, %s189
      %p196 = scmp.eq.s32.totalorder %s32, 1
      %p197 = por %p195, %p196
      %p198 = scmp.ne.s32.totalorder %s189, %s190
      %p199 = scmp.eq.s32.totalorder %s32, 0
      %p200 = por %p198, %p199
      %p201 = scmp.ne.s32.totalorder %s189, %s190
      %p202 = scmp.eq.s32.totalorder %s33, 1
      %p203 = por %p201, %p202
      %p205 = scmp.ne.s32.totalorder %s190, %s204
      %p206 = scmp.eq.s32.totalorder %s33, 0
      %p207 = por %p205, %p206
      %s209 = sadd.s32 %s208, 1
      %p212 = scmp.eq.s32.totalorder %s27, 1
      %p213 = scmp.ne.s32.totalorder %s208, %s210
      %p214 = scmp.eq.s32.totalorder %s27, 0
      %p215 = por %p213, %p214
      %p216 = scmp.ne.s32.totalorder %s208, %s210
      %p217 = scmp.eq.s32.totalorder %s32, 1
      %p218 = por %p216, %p217
      %p219 = scmp.ne.s32.totalorder %s210, %s211
      %p220 = scmp.eq.s32.totalorder %s32, 0
      %p221 = por %p219, %p220
      %p222 = scmp.ne.s32.totalorder %s210, %s211
      %p223 = scmp.eq.s32.totalorder %s33, 1
      %p224 = por %p222, %p223
      %p226 = scmp.ne.s32.totalorder %s211, %s225
      %p227 = scmp.eq.s32.totalorder %s33, 0
      %p228 = por %p226, %p227
      %s230 = sadd.s32 %s229, 1
      %p233 = scmp.eq.s32.totalorder %s27, 1
      %p234 = scmp.ne.s32.totalorder %s229, %s231
      %p235 = scmp.eq.s32.totalorder %s27, 0
      %p236 = por %p234, %p235
      %p237 = scmp.ne.s32.totalorder %s229, %s231
      %p238 = scmp.eq.s32.totalorder %s32, 1
      %p239 = por %p237, %p238
      %p240 = scmp.ne.s32.totalorder %s231, %s232
      %p241 = scmp.eq.s32.totalorder %s32, 0
      %p242 = por %p240, %p241
      %p243 = scmp.ne.s32.totalorder %s231, %s232
      %p244 = scmp.eq.s32.totalorder %s33, 1
      %p245 = por %p243, %p244
      %p247 = scmp.ne.s32.totalorder %s232, %s246
      %p248 = scmp.eq.s32.totalorder %s33, 0
      %p249 = por %p247, %p248
      %s251 = sadd.s32 %s250, 1
      %p254 = scmp.eq.s32.totalorder %s27, 1
      %p255 = scmp.ne.s32.totalorder %s250, %s252
      %p256 = scmp.eq.s32.totalorder %s27, 0
      %p257 = por %p255, %p256
      %p258 = scmp.ne.s32.totalorder %s250, %s252
      %p259 = scmp.eq.s32.totalorder %s32, 1
      %p260 = por %p258, %p259
      %p261 = scmp.ne.s32.totalorder %s252, %s253
      %p262 = scmp.eq.s32.totalorder %s32, 0
      %p263 = por %p261, %p262
      %p264 = scmp.ne.s32.totalorder %s252, %s253
      %p265 = scmp.eq.s32.totalorder %s33, 1
      %p266 = por %p264, %p265
      %p268 = scmp.ne.s32.totalorder %s253, %s267
      %p269 = scmp.eq.s32.totalorder %s33, 0
      %p270 = por %p268, %p269
      %s272 = sadd.s32 %s271, 1
      %p275 = scmp.eq.s32.totalorder %s27, 1
      %p276 = scmp.ne.s32.totalorder %s271, %s273
      %p277 = scmp.eq.s32.totalorder %s27, 0
      %p278 = por %p276, %p277
      %p279 = scmp.ne.s32.totalorder %s271, %s273
      %p280 = scmp.eq.s32.totalorder %s32, 1
      %p281 = por %p279, %p280
      %p282 = scmp.ne.s32.totalorder %s273, %s274
      %p283 = scmp.eq.s32.totalorder %s32, 0
      %p284 = por %p282, %p283
      %p285 = scmp.ne.s32.totalorder %s273, %s274
      %p286 = scmp.eq.s32.totalorder %s33, 1
      %p287 = por %p285, %p286
      %p289 = scmp.ne.s32.totalorder %s274, %s288
      %p290 = scmp.eq.s32.totalorder %s33, 0
      %p291 = por %p289, %p290
      %s293 = sadd.s32 %s292, 1
      %p296 = scmp.eq.s32.totalorder %s27, 1
      %p297 = scmp.ne.s32.totalorder %s292, %s294
      %p298 = scmp.eq.s32.totalorder %s27, 0
      %p299 = por %p297, %p298
      %p300 = scmp.ne.s32.totalorder %s292, %s294
      %p301 = scmp.eq.s32.totalorder %s32, 1
      %p302 = por %p300, %p301
      %p303 = scmp.ne.s32.totalorder %s294, %s295
      %p304 = scmp.eq.s32.totalorder %s32, 0
      %p305 = por %p303, %p304
      %p306 = scmp.ne.s32.totalorder %s294, %s295
      %p307 = scmp.eq.s32.totalorder %s33, 1
      %p308 = por %p306, %p307
      %p310 = scmp.ne.s32.totalorder %s295, %s309
      %p311 = scmp.eq.s32.totalorder %s33, 0
      %p312 = por %p310, %p311
      %s314 = sadd.s32 %s313, 1
      %p317 = scmp.eq.s32.totalorder %s27, 1
      %p318 = scmp.ne.s32.totalorder %s313, %s315
      %p319 = scmp.eq.s32.totalorder %s27, 0
      %p320 = por %p318, %p319
      %p321 = scmp.ne.s32.totalorder %s313, %s315
      %p322 = scmp.eq.s32.totalorder %s32, 1
      %p323 = por %p321, %p322
      %p324 = scmp.ne.s32.totalorder %s315, %s316
      %p325 = scmp.eq.s32.totalorder %s32, 0
      %p326 = por %p324, %p325
      %p327 = scmp.ne.s32.totalorder %s315, %s316
      %p328 = scmp.eq.s32.totalorder %s33, 1
      %p329 = por %p327, %p328
      %p331 = scmp.ne.s32.totalorder %s316, %s330
      %p332 = scmp.eq.s32.totalorder %s33, 0
      %p333 = por %p331, %p332
      %s335 = sadd.s32 %s334, 1
      %p338 = scmp.eq.s32.totalorder %s27, 1
      %p339 = scmp.ne.s32.totalorder %s334, %s336
      %p340 = scmp.eq.s32.totalorder %s27, 0
      %p341 = por %p339, %p340
      %p342 = scmp.ne.s32.totalorder %s334, %s336
      %p343 = scmp.eq.s32.totalorder %s32, 1
      %p344 = por %p342, %p343
      %p345 = scmp.ne.s32.totalorder %s336, %s337
      %p346 = scmp.eq.s32.totalorder %s32, 0
      %p347 = por %p345, %p346
      %p348 = scmp.ne.s32.totalorder %s336, %s337
      %p349 = scmp.eq.s32.totalorder %s33, 1
      %p350 = por %p348, %p349
      %p352 = scmp.ne.s32.totalorder %s337, %s351
      %p353 = scmp.eq.s32.totalorder %s33, 0
      %p354 = por %p352, %p353
      %s355 = ssub.s32 %s27, %s34
      %p356 = scmp.eq.s32.totalorder %s355, 0
      %s358 = sadd.s32 %s357, 1
      %s359 = scalar_select %p356, %s357, %s358
      %p362 = pneg %p356
      %p363 = scmp.eq.s32.totalorder %s27, 1
      %p364 = por %p362, %p363
      %p365 = scmp.ne.s32.totalorder %s357, %s360
      %p366 = scmp.eq.s32.totalorder %s27, 0
      %p367 = por %p365, %p366
      %p368 = scmp.ne.s32.totalorder %s357, %s360
      %p369 = scmp.eq.s32.totalorder %s32, 1
      %p370 = por %p368, %p369
      %p371 = scmp.ne.s32.totalorder %s360, %s361
      %p372 = scmp.eq.s32.totalorder %s32, 0
      %p373 = por %p371, %p372
      %p374 = scmp.ne.s32.totalorder %s360, %s361
      %p375 = scmp.eq.s32.totalorder %s33, 1
      %p376 = por %p374, %p375
      %p378 = scmp.ne.s32.totalorder %s361, %s377
      %p379 = scmp.eq.s32.totalorder %s33, 0
      %p380 = por %p378, %p379
      %p381 = scmp.le.s32.totalorder 1, %s27
      %p382 = scmp.lt.s32.totalorder %s27, 3
      %p383 = pnand %p381, %p382
      %p384 = pneg %p383
      // Predicated region
      $region9: #{tpu_custom_call.1} parent=5 // pred_check
        _
      $region10: #{tpu_custom_call.1} parent=5 // pred_check_branch
        %386 = sbr.rel (%p383) target = $region12
      $region11: #{tpu_custom_call.1} parent=5 // pred_region
        %s387 = ssub.s32 %s27, 1
        // Predicated region
        $region13: #{tpu_custom_call.1} parent=11 // pred_check
          %p388 = pneg %p74
        $region14: #{tpu_custom_call.1} parent=11 // pred_check_branch
          %390 = sbr.rel (%p388) target = $region16
        $region15: #{tpu_custom_call.1} parent=11 // pred_region
          _
        $region16: #{tpu_custom_call.1} parent=11 // pred_fallthru
          _
        // Predicated region
        $region17: #{tpu_custom_call.1} parent=11 // pred_check
          %p391 = pneg %p95
        $region18: #{tpu_custom_call.1} parent=11 // pred_check_branch
          %393 = sbr.rel (%p391) target = $region20
        $region19: #{tpu_custom_call.1} parent=11 // pred_region
          %s395 = ssub.s32 64, 64
          %396 = vsyncadd [#allocation3], %s395
          %s398 = sshll.u32 [#allocation2], 4
          %s399 = int_to_ptr.vmem [resolvable:$true] %s398
          %401 = dma.hbm_to_vmem [thread:$0]  %s2, 64, %s399, [#allocation3]
        $region20: #{tpu_custom_call.1} parent=11 // pred_fallthru
          _
        // Predicated region
        $region21: #{tpu_custom_call.1} parent=11 // pred_check
          %p402 = pneg %p116
        $region22: #{tpu_custom_call.1} parent=11 // pred_check_branch
          %404 = sbr.rel (%p402) target = $region24
        $region23: #{tpu_custom_call.1} parent=11 // pred_region
          %s406 = ssub.s32 32, 32
          %407 = vsyncadd [#allocation6], %s406
          %s409 = sshll.u32 [#allocation5], 4
          %s410 = int_to_ptr.vmem [resolvable:$true] %s409
          %412 = dma.hbm_to_vmem [thread:$0]  %s3, 32, %s410, [#allocation6]
        $region24: #{tpu_custom_call.1} parent=11 // pred_fallthru
          _
        // Predicated region
        $region25: #{tpu_custom_call.1} parent=11 // pred_check
          %p413 = pneg %p137
        $region26: #{tpu_custom_call.1} parent=11 // pred_check_branch
          %415 = sbr.rel (%p413) target = $region28
        $region27: #{tpu_custom_call.1} parent=11 // pred_region
          %s417 = ssub.s32 16, 16
          %418 = vsyncadd [#allocation6], %s417
          %s420 = sshll.u32 [#allocation7], 4
          %s421 = int_to_ptr.vmem [resolvable:$true] %s420
          %423 = dma.hbm_to_vmem [thread:$0]  %s4, 16, %s421, [#allocation6]
        $region28: #{tpu_custom_call.1} parent=11 // pred_fallthru
          _
        // Predicated region
        $region29: #{tpu_custom_call.1} parent=11 // pred_check
          %p424 = pneg %p158
        $region30: #{tpu_custom_call.1} parent=11 // pred_check_branch
          %426 = sbr.rel (%p424) target = $region32
        $region31: #{tpu_custom_call.1} parent=11 // pred_region
          _
        $region32: #{tpu_custom_call.1} parent=11 // pred_fallthru
          _
        // Predicated region
        $region33: #{tpu_custom_call.1} parent=11 // pred_check
          %p427 = pneg %p179
        $region34: #{tpu_custom_call.1} parent=11 // pred_check_branch
          %429 = sbr.rel (%p427) target = $region36
        $region35: #{tpu_custom_call.1} parent=11 // pred_region
          %s431 = ssub.s32 32, 32
          %432 = vsyncadd [#allocation9], %s431
          %s434 = sshll.u32 [#allocation8], 4
          %s435 = int_to_ptr.vmem [resolvable:$true] %s434
          %437 = dma.hbm_to_vmem [thread:$0]  %s6, 32, %s435, [#allocation9]
        $region36: #{tpu_custom_call.1} parent=11 // pred_fallthru
          _
        // Predicated region
        $region37: #{tpu_custom_call.1} parent=11 // pred_check
          %p438 = pneg %p200
        $region38: #{tpu_custom_call.1} parent=11 // pred_check_branch
          %440 = sbr.rel (%p438) target = $region40
        $region39: #{tpu_custom_call.1} parent=11 // pred_region
          %s442 = ssub.s32 16, 16
          %443 = vsyncadd [#allocation9], %s442
          %s445 = sshll.u32 [#allocation10], 4
          %s446 = int_to_ptr.vmem [resolvable:$true] %s445
          %448 = dma.hbm_to_vmem [thread:$0]  %s7, 16, %s446, [#allocation9]
        $region40: #{tpu_custom_call.1} parent=11 // pred_fallthru
          _
        // Predicated region
        $region41: #{tpu_custom_call.1} parent=11 // pred_check
          %p449 = pneg %p221
        $region42: #{tpu_custom_call.1} parent=11 // pred_check_branch
          %451 = sbr.rel (%p449) target = $region44
        $region43: #{tpu_custom_call.1} parent=11 // pred_region
          _
        $region44: #{tpu_custom_call.1} parent=11 // pred_fallthru
          _
        // Predicated region
        $region45: #{tpu_custom_call.1} parent=11 // pred_check
          %p452 = pneg %p242
        $region46: #{tpu_custom_call.1} parent=11 // pred_check_branch
          %454 = sbr.rel (%p452) target = $region48
        $region47: #{tpu_custom_call.1} parent=11 // pred_region
          _
        $region48: #{tpu_custom_call.1} parent=11 // pred_fallthru
          _
        // Predicated region
        $region49: #{tpu_custom_call.1} parent=11 // pred_check
          %p455 = pneg %p263
        $region50: #{tpu_custom_call.1} parent=11 // pred_check_branch
          %457 = sbr.rel (%p455) target = $region52
        $region51: #{tpu_custom_call.1} parent=11 // pred_region
          _
        $region52: #{tpu_custom_call.1} parent=11 // pred_fallthru
          _
        // Predicated region
        $region53: #{tpu_custom_call.1} parent=11 // pred_check
          %p458 = pneg %p284
        $region54: #{tpu_custom_call.1} parent=11 // pred_check_branch
          %460 = sbr.rel (%p458) target = $region56
        $region55: #{tpu_custom_call.1} parent=11 // pred_region
          _
        $region56: #{tpu_custom_call.1} parent=11 // pred_fallthru
          _
        // Predicated region
        $region57: #{tpu_custom_call.1} parent=11 // pred_check
          %p461 = pneg %p305
        $region58: #{tpu_custom_call.1} parent=11 // pred_check_branch
          %463 = sbr.rel (%p461) target = $region60
        $region59: #{tpu_custom_call.1} parent=11 // pred_region
          _
        $region60: #{tpu_custom_call.1} parent=11 // pred_fallthru
          _
        // Predicated region
        $region61: #{tpu_custom_call.1} parent=11 // pred_check
          %p464 = pneg %p326
        $region62: #{tpu_custom_call.1} parent=11 // pred_check_branch
          %466 = sbr.rel (%p464) target = $region64
        $region63: #{tpu_custom_call.1} parent=11 // pred_region
          _
        $region64: #{tpu_custom_call.1} parent=11 // pred_fallthru
          _
        // Predicated region
        $region65: #{tpu_custom_call.1} parent=11 // pred_check
          %p467 = pneg %p347
        $region66: #{tpu_custom_call.1} parent=11 // pred_check_branch
          %469 = sbr.rel (%p467) target = $region68
        $region67: #{tpu_custom_call.1} parent=11 // pred_region
          _
        $region68: #{tpu_custom_call.1} parent=11 // pred_fallthru
          _
      $region12: #{tpu_custom_call.1} parent=5 // pred_fallthru
        _
      %p470 = scmp.lt.s32.totalorder %s27, 2
      // Predicated region
      $region69: #{tpu_custom_call.1} parent=5 // pred_check
        %p471 = pneg %p470
      $region70: #{tpu_custom_call.1} parent=5 // pred_check_branch
        %473 = sbr.rel (%p471) target = $region72
      $region71: #{tpu_custom_call.1} parent=5 // pred_region
        // Predicated region
        $region73: #{tpu_custom_call.1} parent=71 // pred_check
          %p474 = pneg %p47
        $region74: #{tpu_custom_call.1} parent=71 // pred_check_branch
          %476 = sbr.rel (%p474) target = $region76
        $region75: #{tpu_custom_call.1} parent=71 // pred_region
          %s477 = smul.u32 2, %s27
          %p478 = scmp.lt.s32.totalorder %s477, 3
          %s479 = scalar_select %p478, %s477, 3
          %s480 = smul.addr %s479, 8
          %s481 = scalar_lea.vmem %s0, %s480
          %s482 = smul.u32 2, %s27
        $region76: #{tpu_custom_call.1} parent=71 // pred_fallthru
          _
      $region72: #{tpu_custom_call.1} parent=5 // pred_fallthru
        _
      %p483 = scmp.le.s32.totalorder 1, %s27
      %p484 = scmp.lt.s32.totalorder %s27, 3
      %p485 = pnand %p483, %p484
      %p486 = pneg %p485
      // Predicated region
      $region77: #{tpu_custom_call.1} parent=5 // pred_check
        _
      $region78: #{tpu_custom_call.1} parent=5 // pred_check_branch
        %488 = sbr.rel (%p485) target = $region80
      $region79: #{tpu_custom_call.1} parent=5 // pred_region
        %s489 = ssub.s32 %s27, 1
        // Predicated region
        $region81: #{tpu_custom_call.1} parent=79 // pred_check
          %p490 = pneg %p95
        $region82: #{tpu_custom_call.1} parent=79 // pred_check_branch
          %492 = sbr.rel (%p490) target = $region84
        $region83: #{tpu_custom_call.1} parent=79 // pred_region
          %493 = dma.done [#allocation3], 64
        $region84: #{tpu_custom_call.1} parent=79 // pred_fallthru
          _
        // Predicated region
        $region85: #{tpu_custom_call.1} parent=79 // pred_check
          %p494 = pneg %p116
        $region86: #{tpu_custom_call.1} parent=79 // pred_check_branch
          %496 = sbr.rel (%p494) target = $region88
        $region87: #{tpu_custom_call.1} parent=79 // pred_region
          %497 = dma.done [#allocation6], 32
        $region88: #{tpu_custom_call.1} parent=79 // pred_fallthru
          _
        // Predicated region
        $region89: #{tpu_custom_call.1} parent=79 // pred_check
          %p498 = pneg %p137
        $region90: #{tpu_custom_call.1} parent=79 // pred_check_branch
          %500 = sbr.rel (%p498) target = $region92
        $region91: #{tpu_custom_call.1} parent=79 // pred_region
          %501 = dma.done [#allocation6], 16
        $region92: #{tpu_custom_call.1} parent=79 // pred_fallthru
          _
        // Predicated region
        $region93: #{tpu_custom_call.1} parent=79 // pred_check
          %p502 = pneg %p179
        $region94: #{tpu_custom_call.1} parent=79 // pred_check_branch
          %504 = sbr.rel (%p502) target = $region96
        $region95: #{tpu_custom_call.1} parent=79 // pred_region
          %505 = dma.done [#allocation9], 32
        $region96: #{tpu_custom_call.1} parent=79 // pred_fallthru
          _
        // Predicated region
        $region97: #{tpu_custom_call.1} parent=79 // pred_check
          %p506 = pneg %p200
        $region98: #{tpu_custom_call.1} parent=79 // pred_check_branch
          %508 = sbr.rel (%p506) target = $region100
        $region99: #{tpu_custom_call.1} parent=79 // pred_region
          %509 = dma.done [#allocation9], 16
        $region100: #{tpu_custom_call.1} parent=79 // pred_fallthru
          _
        %s510 = smul.u32 2, %s32
        %p511 = scmp.lt.s32.totalorder %s510, 3
        %s512 = scalar_select %p511, %s510, 3
        %s513 = smul.addr %s512, 8
        %s514 = scalar_lea.vmem %s0, %s513
        %p515 = pneg %p53
        %p516 = pneg %p50
        %p517 = pneg %p74
        %p518 = pneg %p71
        %p519 = pneg %p95
        %p520 = pneg %p92
        %p521 = pneg %p116
        %p522 = pneg %p113
        %p523 = pneg %p137
        %p524 = pneg %p134
        %p525 = pneg %p158
        %p526 = pneg %p155
        %p527 = pneg %p179
        %p528 = pneg %p176
        %p529 = pneg %p200
        %p530 = pneg %p197
        %p531 = pneg %p221
        %p532 = pneg %p218
        %p533 = pneg %p242
        %p534 = pneg %p239
        %p535 = pneg %p263
        %p536 = pneg %p260
        %p537 = pneg %p284
        %p538 = pneg %p281
        %p539 = pneg %p305
        %p540 = pneg %p302
        %p541 = pneg %p326
        %p542 = pneg %p323
        %p543 = pneg %p347
        %p544 = pneg %p344
        %p545 = pneg %p373
        %p546 = pneg %p370
        %s547 = sand.u32 %s360, 1
        %s548 = scalar_lea.sflag [#allocation4], %s547
        %s549 = sand.u32 %s360, 1
        %s550 = scalar_lea.vmem [#allocation11], %s549
        %s551 = smul.u32 2, %s32
        %p552 = scmp.lt.s32.totalorder %s551, 3
        %s553 = scalar_select %p552, %s551, 3
        %s554 = smul.addr %s553, 8
        %s555 = scalar_lea.vmem %s0, %s554
        %s556 = smul.u32 2, %s32
        %v557 = vld [vmem:[%s1] sm:$0xff]
        %v558 = vld [vmem:[%s1 + $0x8] sm:$0xff]
        %v559 = vld [vmem:[%s555] sm:$0xff]
        %v560 = vld [vmem:[%s555 + $0x8] sm:$0xff]
        %v561 = vld [vmem:[#allocation2] sm:$0xf]
        %v562 = vld [vmem:[#allocation5] sm:$0x3]
        %v563 = vld [vmem:[#allocation7] sm:$0x1]
        %vm564 = vcmask 31744
        %v566 = vsel %vm564, %v559, 0
        %v569 = vsel %vm564, %v560, 0
        %vm571 = vcmask 1043456
        %v573 = vsel %vm571, %v561, 0
        %575 = vmatprep.subr.mxu0 0.0
        %576 = vmatpush1.msra.mxu0 0.0
        %577 = vmatprep.subr.mxu0 0.0
        %578 = vmatpush1.msra.mxu0 0.0
        %579 = vmatprep.subr.mxu0 0.0
        %580 = vmatpush1.msra.mxu0 0.0
        %581 = vmatprep.subr.mxu0 0.0
        %582 = vmatpush1.msra.mxu0 0.0
        %583 = vmatprep.subr.mxu0 0.0
        %584 = vmatpush1.msra.mxu0 0.0
        %585 = vmatprep.subr.mxu0 0.0
        %586 = vmatpush1.msra.mxu0 0.0
        %587 = vmatprep.subr.mxu0 0.0
        %588 = vmatpush1.msra.mxu0 0.0
        %589 = vmatprep.subr.mxu0 0.0
        %590 = vmatpush1.msra.mxu0 0.0
        %591 = vmatprep.subr.mxu0 0.0
        %592 = vmatpush1.msra.mxu0 0.0
        %593 = vmatprep.subr.mxu0 0.0
        %594 = vmatpush1.msra.mxu0 0.0
        %595 = vmatprep.subr.mxu0 0.0
        %596 = vmatpush1.msra.mxu0 0.0
        %597 = vmatprep.subr.mxu0 0.0
        %598 = vmatpush1.msra.mxu0 0.0
        %599 = vmatprep.subr.mxu0 0.0
        %600 = vmatpush1.msra.mxu0 0.0
        %601 = vmatprep.subr.mxu0 0.0
        %602 = vmatpush1.msra.mxu0 0.0
        %603 = vmatprep.subr.mxu0 0.0
        %604 = vmatpush1.msra.mxu0 0.0
        %605 = vmatprep.subr.mxu0 0.0
        %606 = vmatpush1.msra.mxu0 %v573
        %607 = vmatprep.subr.mxu0 0.0
        %608 = vmatpush2.msra.mxu0 0.0
        %609 = vmatprep.subr.mxu0 0.0
        %610 = vmatpush2.msra.mxu0 0.0
        %611 = vmatprep.subr.mxu0 0.0
        %612 = vmatpush2.msra.mxu0 0.0
        %613 = vmatprep.subr.mxu0 0.0
        %614 = vmatpush2.msra.mxu0 0.0
        %615 = vmatprep.subr.mxu0 0.0
        %616 = vmatpush2.msra.mxu0 0.0
        %617 = vmatprep.subr.mxu0 0.0
        %618 = vmatpush2.msra.mxu0 0.0
        %619 = vmatprep.subr.mxu0 0.0
        %620 = vmatpush2.msra.mxu0 0.0
        %621 = vmatprep.subr.mxu0 0.0
        %622 = vmatpush2.msra.mxu0 0.0
        %623 = vmatprep.subr.mxu0 0.0
        %624 = vmatpush2.msra.mxu0 0.0
        %625 = vmatprep.subr.mxu0 0.0
        %626 = vmatpush2.msra.mxu0 0.0
        %627 = vmatprep.subr.mxu0 0.0
        %628 = vmatpush2.msra.mxu0 0.0
        %629 = vmatprep.subr.mxu0 0.0
        %630 = vmatpush2.msra.mxu0 0.0
        %631 = vmatprep.subr.mxu0 0.0
        %632 = vmatpush2.msra.mxu0 0.0
        %633 = vmatprep.subr.mxu0 0.0
        %634 = vmatpush2.msra.mxu0 0.0
        %635 = vmatprep.subr.mxu0 0.0
        %636 = vmatpush2.msra.mxu0 0.0
        %637 = vmatprep.subr.mxu0 0.0
        %638 = vmatpush2.msra.mxu0 0.0
        %639 = vmatprep.mubr.f32.mxu0 0.0
        %640 = vmatmul.mubr.f32.gmra.mxu0 %v566
        %v641 = vpop.f32.mrf.mxu0
        %v642 = vadd.f32 0.0, %v641
        %v643 = vpop.f32.mrf.mxu0
        %644 = vmatprep.mubr.f32.mxu0 0.0
        %645 = vmatmul.mubr.f32.gmra.mxu0 %v569
        %v646 = vpop.f32.mrf.mxu0
        %v647 = vadd.f32 0.0, %v646
        %v648 = vpop.f32.mrf.mxu0
        %649 = vdwg.mxu0
        %v651 = vsel %vm564, %v562, 0
        %653 = vmatprep.subr.mxu0 0.0
        %654 = vmatpush1.xpose.msra.mxu0 0.0
        %655 = vmatprep.subr.mxu0 0.0
        %656 = vmatpush1.xpose.msra.mxu0 0.0
        %657 = vmatprep.subr.mxu0 0.0
        %658 = vmatpush1.xpose.msra.mxu0 0.0
        %659 = vmatprep.subr.mxu0 0.0
        %660 = vmatpush1.xpose.msra.mxu0 0.0
        %661 = vmatprep.subr.mxu0 0.0
        %662 = vmatpush1.xpose.msra.mxu0 0.0
        %663 = vmatprep.subr.mxu0 0.0
        %664 = vmatpush1.xpose.msra.mxu0 0.0
        %665 = vmatprep.subr.mxu0 0.0
        %666 = vmatpush1.xpose.msra.mxu0 0.0
        %667 = vmatprep.subr.mxu0 0.0
        %668 = vmatpush1.xpose.msra.mxu0 0.0
        %669 = vmatprep.subr.mxu0 0.0
        %670 = vmatpush1.xpose.msra.mxu0 0.0
        %671 = vmatprep.subr.mxu0 0.0
        %672 = vmatpush1.xpose.msra.mxu0 0.0
        %673 = vmatprep.subr.mxu0 0.0
        %674 = vmatpush1.xpose.msra.mxu0 0.0
        %675 = vmatprep.subr.mxu0 0.0
        %676 = vmatpush1.xpose.msra.mxu0 0.0
        %677 = vmatprep.subr.mxu0 0.0
        %678 = vmatpush1.xpose.msra.mxu0 0.0
        %679 = vmatprep.subr.mxu0 0.0
        %680 = vmatpush1.xpose.msra.mxu0 0.0
        %681 = vmatprep.subr.mxu0 0.0
        %682 = vmatpush1.xpose.msra.mxu0 %v569
        %683 = vmatprep.subr.mxu0 0.0
        %684 = vmatpush1.xpose.msra.mxu0 %v566
        %685 = vmatprep.subr.mxu0 0.0
        %686 = vmatpush2.xpose.msra.mxu0 0.0
        %687 = vmatprep.subr.mxu0 0.0
        %688 = vmatpush2.xpose.msra.mxu0 0.0
        %689 = vmatprep.subr.mxu0 0.0
        %690 = vmatpush2.xpose.msra.mxu0 0.0
        %691 = vmatprep.subr.mxu0 0.0
        %692 = vmatpush2.xpose.msra.mxu0 0.0
        %693 = vmatprep.subr.mxu0 0.0
        %694 = vmatpush2.xpose.msra.mxu0 0.0
        %695 = vmatprep.subr.mxu0 0.0
        %696 = vmatpush2.xpose.msra.mxu0 0.0
        %697 = vmatprep.subr.mxu0 0.0
        %698 = vmatpush2.xpose.msra.mxu0 0.0
        %699 = vmatprep.subr.mxu0 0.0
        %700 = vmatpush2.xpose.msra.mxu0 0.0
        %701 = vmatprep.subr.mxu0 0.0
        %702 = vmatpush2.xpose.msra.mxu0 0.0
        %703 = vmatprep.subr.mxu0 0.0
        %704 = vmatpush2.xpose.msra.mxu0 0.0
        %705 = vmatprep.subr.mxu0 0.0
        %706 = vmatpush2.xpose.msra.mxu0 0.0
        %707 = vmatprep.subr.mxu0 0.0
        %708 = vmatpush2.xpose.msra.mxu0 0.0
        %709 = vmatprep.subr.mxu0 0.0
        %710 = vmatpush2.xpose.msra.mxu0 0.0
        %711 = vmatprep.subr.mxu0 0.0
        %712 = vmatpush2.xpose.msra.mxu0 0.0
        %713 = vmatprep.subr.mxu0 0.0
        %714 = vmatpush2.xpose.msra.mxu0 0.0
        %715 = vmatprep.subr.mxu0 0.0
        %716 = vmatpush2.xpose.msra.mxu0 0.0
        %717 = vmatprep.mubr.f32.mxu0 0.0
        %718 = vmatmul.mubr.f32.gmra.mxu0 %v651
        %v719 = vpop.f32.mrf.mxu0
        %v720 = vadd.f32 0.0, %v719
        %v721 = vpop.f32.mrf.mxu0
        %722 = vdwg.mxu0
        %724 = vset.pattern.permute.xlu0 16
        %725 = vperm.xlu0 %724, %v642
        %v726 = vpop.permute.xlu0 %725
        %729 = vset.pattern.permute.xlu0 16
        %730 = vperm.xlu0 %729, %v647
        %v731 = vpop.permute.xlu0 %730
        %v733 = vlaneseq
        %v734 = vshrl.u32 %v733, 7
        %v735 = vsub.s32 0, %v734
        %v736 = vrot.slane %v720, %v735
        %v737 = vadd.f32 %v726, %v736
        %v738 = vadd.f32 %v731, %v736
        %vm739 = vcmp.gt.f32.partialorder %v737, 0.0
        %vm740 = vcmp.gt.f32.partialorder %v738, 0.0
        %v741 = vmul.f32 %v737, 0.2
        %v742 = vmul.f32 %v738, 0.2
        %v743 = vsel %vm739, %v737, %v741
        %v744 = vsel %vm740, %v738, %v742
        %v745 = vadd.f32 %v743, %v557
        %v746 = vadd.f32 %v744, %v558
        %vm747 = vcmask 130048
        %v748 = vsel %vm747, %v745, -inf
        %749 = vmax.xlane.f32.xlu0 %v748
        %v750 = vpop.xlane.xlu0 %749
        %v751 = vsel %vm747, %v746, -inf
        %752 = vmax.xlane.f32.xlu0 %v751
        %v753 = vpop.xlane.xlu0 %752
        %v754 = vsub.f32 %v745, %v750
        %v755 = vsub.f32 %v746, %v753
        %v756 = vmul.f32 %v754, 1.442695
        %v757 = vpow.pop %v756
        %v758 = vmul.f32 %v755, 1.442695
        %v759 = vpow.pop %v758
        %v760 = vsel %vm747, %v757, 0.0
        %761 = vadd.xlane.f32.xlu0 %v760
        %v762 = vpop.xlane.xlu0 %761
        %v763 = vsel %vm747, %v759, 0.0
        %764 = vadd.xlane.f32.xlu0 %v763
        %v765 = vpop.xlane.xlu0 %764
        %v767 = vsel %vm747, %v757, 0
        %v770 = vsel %vm747, %v759, 0
        %772 = vmatprep.subr.mxu0 0.0
        %773 = vmatpush1.msra.mxu0 0.0
        %774 = vmatprep.subr.mxu0 0.0
        %775 = vmatpush1.msra.mxu0 0.0
        %776 = vmatprep.subr.mxu0 0.0
        %777 = vmatpush1.msra.mxu0 0.0
        %778 = vmatprep.subr.mxu0 0.0
        %779 = vmatpush1.msra.mxu0 0.0
        %780 = vmatprep.subr.mxu0 0.0
        %781 = vmatpush1.msra.mxu0 0.0
        %782 = vmatprep.subr.mxu0 0.0
        %783 = vmatpush1.msra.mxu0 0.0
        %784 = vmatprep.subr.mxu0 0.0
        %785 = vmatpush1.msra.mxu0 0.0
        %786 = vmatprep.subr.mxu0 0.0
        %787 = vmatpush1.msra.mxu0 0.0
        %788 = vmatprep.subr.mxu0 0.0
        %789 = vmatpush1.msra.mxu0 0.0
        %790 = vmatprep.subr.mxu0 0.0
        %791 = vmatpush1.msra.mxu0 0.0
        %792 = vmatprep.subr.mxu0 0.0
        %793 = vmatpush1.msra.mxu0 0.0
        %794 = vmatprep.subr.mxu0 0.0
        %795 = vmatpush1.msra.mxu0 0.0
        %796 = vmatprep.subr.mxu0 0.0
        %797 = vmatpush1.msra.mxu0 0.0
        %798 = vmatprep.subr.mxu0 0.0
        %799 = vmatpush1.msra.mxu0 0.0
        %800 = vmatprep.subr.mxu0 0.0
        %801 = vmatpush1.msra.mxu0 %v647
        %802 = vmatprep.subr.mxu0 0.0
        %803 = vmatpush1.msra.mxu0 %v642
        %804 = vmatprep.subr.mxu0 0.0
        %805 = vmatpush2.msra.mxu0 0.0
        %806 = vmatprep.subr.mxu0 0.0
        %807 = vmatpush2.msra.mxu0 0.0
        %808 = vmatprep.subr.mxu0 0.0
        %809 = vmatpush2.msra.mxu0 0.0
        %810 = vmatprep.subr.mxu0 0.0
        %811 = vmatpush2.msra.mxu0 0.0
        %812 = vmatprep.subr.mxu0 0.0
        %813 = vmatpush2.msra.mxu0 0.0
        %814 = vmatprep.subr.mxu0 0.0
        %815 = vmatpush2.msra.mxu0 0.0
        %816 = vmatprep.subr.mxu0 0.0
        %817 = vmatpush2.msra.mxu0 0.0
        %818 = vmatprep.subr.mxu0 0.0
        %819 = vmatpush2.msra.mxu0 0.0
        %820 = vmatprep.subr.mxu0 0.0
        %821 = vmatpush2.msra.mxu0 0.0
        %822 = vmatprep.subr.mxu0 0.0
        %823 = vmatpush2.msra.mxu0 0.0
        %824 = vmatprep.subr.mxu0 0.0
        %825 = vmatpush2.msra.mxu0 0.0
        %826 = vmatprep.subr.mxu0 0.0
        %827 = vmatpush2.msra.mxu0 0.0
        %828 = vmatprep.subr.mxu0 0.0
        %829 = vmatpush2.msra.mxu0 0.0
        %830 = vmatprep.subr.mxu0 0.0
        %831 = vmatpush2.msra.mxu0 0.0
        %832 = vmatprep.subr.mxu0 0.0
        %833 = vmatpush2.msra.mxu0 0.0
        %834 = vmatprep.subr.mxu0 0.0
        %835 = vmatpush2.msra.mxu0 0.0
        %836 = vmatprep.mubr.f32.mxu0 0.0
        %837 = vmatmul.mubr.f32.gmra.mxu0 %v767
        %v838 = vpop.f32.mrf.mxu0
        %v839 = vadd.f32 0.0, %v838
        %v840 = vpop.f32.mrf.mxu0
        %841 = vmatprep.mubr.f32.mxu0 0.0
        %842 = vmatmul.mubr.f32.gmra.mxu0 %v770
        %v843 = vpop.f32.mrf.mxu0
        %v844 = vadd.f32 0.0, %v843
        %v845 = vpop.f32.mrf.mxu0
        %846 = vdwg.mxu0
        %v847 = vrcp.pop %v762
        %v848 = vrcp.pop %v765
        %v849 = vmul.f32 %v839, %v847
        %v850 = vmul.f32 %v844, %v848
        %851 = vset.pattern.permute.xlu0 17
        %852 = vperm.xlu0 %851, %v642
        %v853 = vpop.permute.xlu0 %852
        %855 = vset.pattern.permute.xlu0 17
        %856 = vperm.xlu0 %855, %v647
        %v857 = vpop.permute.xlu0 %856
        %v859 = vlaneseq
        %v860 = vshrl.u32 %v859, 7
        %v861 = vsub.s32 1, %v860
        %v862 = vrot.slane %v720, %v861
        %v863 = vadd.f32 %v853, %v862
        %v864 = vadd.f32 %v857, %v862
        %vm865 = vcmp.gt.f32.partialorder %v863, 0.0
        %vm866 = vcmp.gt.f32.partialorder %v864, 0.0
        %v867 = vmul.f32 %v863, 0.2
        %v868 = vmul.f32 %v864, 0.2
        %v869 = vsel %vm865, %v863, %v867
        %v870 = vsel %vm866, %v864, %v868
        %v871 = vadd.f32 %v869, %v557
        %v872 = vadd.f32 %v870, %v558
        %v873 = vsel %vm747, %v871, -inf
        %874 = vmax.xlane.f32.xlu0 %v873
        %v875 = vpop.xlane.xlu0 %874
        %v876 = vsel %vm747, %v872, -inf
        %877 = vmax.xlane.f32.xlu0 %v876
        %v878 = vpop.xlane.xlu0 %877
        %v879 = vsub.f32 %v871, %v875
        %v880 = vsub.f32 %v872, %v878
        %v881 = vmul.f32 %v879, 1.442695
        %v882 = vpow.pop %v881
        %v883 = vmul.f32 %v880, 1.442695
        %v884 = vpow.pop %v883
        %v885 = vsel %vm747, %v882, 0.0
        %886 = vadd.xlane.f32.xlu0 %v885
        %v887 = vpop.xlane.xlu0 %886
        %v888 = vsel %vm747, %v884, 0.0
        %889 = vadd.xlane.f32.xlu0 %v888
        %v890 = vpop.xlane.xlu0 %889
        %891 = vrot.lane.b32.xlu0 %v642, 120
        %v892 = vpop.permute.xlu0 %891
        %893 = vrot.lane.b32.xlu0 %v647, 120
        %v894 = vpop.permute.xlu0 %893
        %v898 = vsel %vm747, %v882, 0
        %v901 = vsel %vm747, %v884, 0
        %903 = vmatprep.subr.mxu0 0.0
        %904 = vmatpush1.msra.mxu0 0.0
        %905 = vmatprep.subr.mxu0 0.0
        %906 = vmatpush1.msra.mxu0 0.0
        %907 = vmatprep.subr.mxu0 0.0
        %908 = vmatpush1.msra.mxu0 0.0
        %909 = vmatprep.subr.mxu0 0.0
        %910 = vmatpush1.msra.mxu0 0.0
        %911 = vmatprep.subr.mxu0 0.0
        %912 = vmatpush1.msra.mxu0 0.0
        %913 = vmatprep.subr.mxu0 0.0
        %914 = vmatpush1.msra.mxu0 0.0
        %915 = vmatprep.subr.mxu0 0.0
        %916 = vmatpush1.msra.mxu0 0.0
        %917 = vmatprep.subr.mxu0 0.0
        %918 = vmatpush1.msra.mxu0 0.0
        %919 = vmatprep.subr.mxu0 0.0
        %920 = vmatpush1.msra.mxu0 0.0
        %921 = vmatprep.subr.mxu0 0.0
        %922 = vmatpush1.msra.mxu0 0.0
        %923 = vmatprep.subr.mxu0 0.0
        %924 = vmatpush1.msra.mxu0 0.0
        %925 = vmatprep.subr.mxu0 0.0
        %926 = vmatpush1.msra.mxu0 0.0
        %927 = vmatprep.subr.mxu0 0.0
        %928 = vmatpush1.msra.mxu0 0.0
        %929 = vmatprep.subr.mxu0 0.0
        %930 = vmatpush1.msra.mxu0 0.0
        %931 = vmatprep.subr.mxu0 0.0
        %932 = vmatpush1.msra.mxu0 %v894
        %933 = vmatprep.subr.mxu0 0.0
        %934 = vmatpush1.msra.mxu0 %v892
        %935 = vmatprep.subr.mxu0 0.0
        %936 = vmatpush2.msra.mxu0 0.0
        %937 = vmatprep.subr.mxu0 0.0
        %938 = vmatpush2.msra.mxu0 0.0
        %939 = vmatprep.subr.mxu0 0.0
        %940 = vmatpush2.msra.mxu0 0.0
        %941 = vmatprep.subr.mxu0 0.0
        %942 = vmatpush2.msra.mxu0 0.0
        %943 = vmatprep.subr.mxu0 0.0
        %944 = vmatpush2.msra.mxu0 0.0
        %945 = vmatprep.subr.mxu0 0.0
        %946 = vmatpush2.msra.mxu0 0.0
        %947 = vmatprep.subr.mxu0 0.0
        %948 = vmatpush2.msra.mxu0 0.0
        %949 = vmatprep.subr.mxu0 0.0
        %950 = vmatpush2.msra.mxu0 0.0
        %951 = vmatprep.subr.mxu0 0.0
        %952 = vmatpush2.msra.mxu0 0.0
        %953 = vmatprep.subr.mxu0 0.0
        %954 = vmatpush2.msra.mxu0 0.0
        %955 = vmatprep.subr.mxu0 0.0
        %956 = vmatpush2.msra.mxu0 0.0
        %957 = vmatprep.subr.mxu0 0.0
        %958 = vmatpush2.msra.mxu0 0.0
        %959 = vmatprep.subr.mxu0 0.0
        %960 = vmatpush2.msra.mxu0 0.0
        %961 = vmatprep.subr.mxu0 0.0
        %962 = vmatpush2.msra.mxu0 0.0
        %963 = vmatprep.subr.mxu0 0.0
        %964 = vmatpush2.msra.mxu0 0.0
        %965 = vmatprep.subr.mxu0 0.0
        %966 = vmatpush2.msra.mxu0 0.0
        %967 = vmatprep.mubr.f32.mxu0 0.0
        %968 = vmatmul.mubr.f32.gmra.mxu0 %v898
        %v969 = vpop.f32.mrf.mxu0
        %v970 = vadd.f32 0.0, %v969
        %v971 = vpop.f32.mrf.mxu0
        %972 = vmatprep.mubr.f32.mxu0 0.0
        %973 = vmatmul.mubr.f32.gmra.mxu0 %v901
        %v974 = vpop.f32.mrf.mxu0
        %v975 = vadd.f32 0.0, %v974
        %v976 = vpop.f32.mrf.mxu0
        %977 = vdwg.mxu0
        %v978 = vrcp.pop %v887
        %v979 = vrcp.pop %v890
        %v980 = vmul.f32 %v970, %v978
        %v981 = vmul.f32 %v975, %v979
        %984 = vrot.lane.b32.xlu0 %v980, 8
        %v985 = vpop.permute.xlu0 %984
        %986 = vrot.lane.b32.xlu0 %v981, 8
        %v987 = vpop.permute.xlu0 %986
        %vm990 = vcmask 64512
        %v991 = vsel %vm990, %v849, %v985
        %v992 = vsel %vm990, %v850, %v987
        %v994 = vlaneseq
        %v995 = vshrl.u32 %v994, 7
        %v996 = vsub.s32 0, %v995
        %v997 = vrot.slane %v563, %v996
        %v999 = vadd.f32 %v991, %v997
        %v1000 = vadd.f32 %v992, %v997
        %vm1001 = vcmp.gt.f32.partialorder %v999, 0.0
        %vm1002 = vcmp.gt.f32.partialorder %v1000, 0.0
        %v1003 = vmul.f32 %v999, 1.442695
        %v1004 = vpow.pop %v1003
        %v1005 = vmul.f32 %v1000, 1.442695
        %v1006 = vpow.pop %v1005
        %v1007 = vsub.f32 %v1004, 1.0
        %v1008 = vsub.f32 %v1006, 1.0
        %v1009 = vsel %vm1001, %v999, %v1007
        %v1010 = vsel %vm1002, %v1000, %v1008
        %v1011 = vld [vmem:[%s5] sm:$0xff]
        %v1012 = vld [vmem:[%s5 + $0x8] sm:$0xff]
        %v1013 = vld [vmem:[#allocation8] sm:$0x3]
        %v1014 = vld [vmem:[#allocation10] sm:$0x1]
        %v1016 = vsel %vm747, %v1009, 0
        %v1019 = vsel %vm747, %v1010, 0
        %1021 = vmatprep.subr.mxu0 0.0
        %1022 = vmatpush1.msra.mxu0 0.0
        %1023 = vmatprep.subr.mxu0 0.0
        %1024 = vmatpush1.msra.mxu0 0.0
        %1025 = vmatprep.subr.mxu0 0.0
        %1026 = vmatpush1.msra.mxu0 0.0
        %1027 = vmatprep.subr.mxu0 0.0
        %1028 = vmatpush1.msra.mxu0 0.0
        %1029 = vmatprep.subr.mxu0 0.0
        %1030 = vmatpush1.msra.mxu0 0.0
        %1031 = vmatprep.subr.mxu0 0.0
        %1032 = vmatpush1.msra.mxu0 0.0
        %1033 = vmatprep.subr.mxu0 0.0
        %1034 = vmatpush1.msra.mxu0 0.0
        %1035 = vmatprep.subr.mxu0 0.0
        %1036 = vmatpush1.msra.mxu0 0.0
        %1037 = vmatprep.subr.mxu0 0.0
        %1038 = vmatpush1.msra.mxu0 0.0
        %1039 = vmatprep.subr.mxu0 0.0
        %1040 = vmatpush1.msra.mxu0 0.0
        %1041 = vmatprep.subr.mxu0 0.0
        %1042 = vmatpush1.msra.mxu0 0.0
        %1043 = vmatprep.subr.mxu0 0.0
        %1044 = vmatpush1.msra.mxu0 0.0
        %1045 = vmatprep.subr.mxu0 0.0
        %1046 = vmatpush1.msra.mxu0 0.0
        %1047 = vmatprep.subr.mxu0 0.0
        %1048 = vmatpush1.msra.mxu0 0.0
        %1049 = vmatprep.subr.mxu0 0.0
        %1050 = vmatpush1.msra.mxu0 %v1012
        %1051 = vmatprep.subr.mxu0 0.0
        %1052 = vmatpush1.msra.mxu0 %v1011
        %1053 = vmatprep.subr.mxu0 0.0
        %1054 = vmatpush2.msra.mxu0 0.0
        %1055 = vmatprep.subr.mxu0 0.0
        %1056 = vmatpush2.msra.mxu0 0.0
        %1057 = vmatprep.subr.mxu0 0.0
        %1058 = vmatpush2.msra.mxu0 0.0
        %1059 = vmatprep.subr.mxu0 0.0
        %1060 = vmatpush2.msra.mxu0 0.0
        %1061 = vmatprep.subr.mxu0 0.0
        %1062 = vmatpush2.msra.mxu0 0.0
        %1063 = vmatprep.subr.mxu0 0.0
        %1064 = vmatpush2.msra.mxu0 0.0
        %1065 = vmatprep.subr.mxu0 0.0
        %1066 = vmatpush2.msra.mxu0 0.0
        %1067 = vmatprep.subr.mxu0 0.0
        %1068 = vmatpush2.msra.mxu0 0.0
        %1069 = vmatprep.subr.mxu0 0.0
        %1070 = vmatpush2.msra.mxu0 0.0
        %1071 = vmatprep.subr.mxu0 0.0
        %1072 = vmatpush2.msra.mxu0 0.0
        %1073 = vmatprep.subr.mxu0 0.0
        %1074 = vmatpush2.msra.mxu0 0.0
        %1075 = vmatprep.subr.mxu0 0.0
        %1076 = vmatpush2.msra.mxu0 0.0
        %1077 = vmatprep.subr.mxu0 0.0
        %1078 = vmatpush2.msra.mxu0 0.0
        %1079 = vmatprep.subr.mxu0 0.0
        %1080 = vmatpush2.msra.mxu0 0.0
        %1081 = vmatprep.subr.mxu0 0.0
        %1082 = vmatpush2.msra.mxu0 0.0
        %1083 = vmatprep.subr.mxu0 0.0
        %1084 = vmatpush2.msra.mxu0 0.0
        %1085 = vmatprep.mubr.f32.mxu0 0.0
        %1086 = vmatmul.mubr.f32.gmra.mxu0 %v1016
        %v1087 = vpop.f32.mrf.mxu0
        %v1088 = vadd.f32 0.0, %v1087
        %v1089 = vpop.f32.mrf.mxu0
        %1090 = vmatprep.mubr.f32.mxu0 0.0
        %1091 = vmatmul.mubr.f32.gmra.mxu0 %v1019
        %v1092 = vpop.f32.mrf.mxu0
        %v1093 = vadd.f32 0.0, %v1092
        %v1094 = vpop.f32.mrf.mxu0
        %1095 = vdwg.mxu0
        %v1097 = vsel %vm747, %v1013, 0
        %1099 = vmatprep.subr.mxu0 0.0
        %1100 = vmatpush1.xpose.msra.mxu0 0.0
        %1101 = vmatprep.subr.mxu0 0.0
        %1102 = vmatpush1.xpose.msra.mxu0 0.0
        %1103 = vmatprep.subr.mxu0 0.0
        %1104 = vmatpush1.xpose.msra.mxu0 0.0
        %1105 = vmatprep.subr.mxu0 0.0
        %1106 = vmatpush1.xpose.msra.mxu0 0.0
        %1107 = vmatprep.subr.mxu0 0.0
        %1108 = vmatpush1.xpose.msra.mxu0 0.0
        %1109 = vmatprep.subr.mxu0 0.0
        %1110 = vmatpush1.xpose.msra.mxu0 0.0
        %1111 = vmatprep.subr.mxu0 0.0
        %1112 = vmatpush1.xpose.msra.mxu0 0.0
        %1113 = vmatprep.subr.mxu0 0.0
        %1114 = vmatpush1.xpose.msra.mxu0 0.0
        %1115 = vmatprep.subr.mxu0 0.0
        %1116 = vmatpush1.xpose.msra.mxu0 0.0
        %1117 = vmatprep.subr.mxu0 0.0
        %1118 = vmatpush1.xpose.msra.mxu0 0.0
        %1119 = vmatprep.subr.mxu0 0.0
        %1120 = vmatpush1.xpose.msra.mxu0 0.0
        %1121 = vmatprep.subr.mxu0 0.0
        %1122 = vmatpush1.xpose.msra.mxu0 0.0
        %1123 = vmatprep.subr.mxu0 0.0
        %1124 = vmatpush1.xpose.msra.mxu0 0.0
        %1125 = vmatprep.subr.mxu0 0.0
        %1126 = vmatpush1.xpose.msra.mxu0 0.0
        %1127 = vmatprep.subr.mxu0 0.0
        %1128 = vmatpush1.xpose.msra.mxu0 %v1019
        %1129 = vmatprep.subr.mxu0 0.0
        %1130 = vmatpush1.xpose.msra.mxu0 %v1016
        %1131 = vmatprep.subr.mxu0 0.0
        %1132 = vmatpush2.xpose.msra.mxu0 0.0
        %1133 = vmatprep.subr.mxu0 0.0
        %1134 = vmatpush2.xpose.msra.mxu0 0.0
        %1135 = vmatprep.subr.mxu0 0.0
        %1136 = vmatpush2.xpose.msra.mxu0 0.0
        %1137 = vmatprep.subr.mxu0 0.0
        %1138 = vmatpush2.xpose.msra.mxu0 0.0
        %1139 = vmatprep.subr.mxu0 0.0
        %1140 = vmatpush2.xpose.msra.mxu0 0.0
        %1141 = vmatprep.subr.mxu0 0.0
        %1142 = vmatpush2.xpose.msra.mxu0 0.0
        %1143 = vmatprep.subr.mxu0 0.0
        %1144 = vmatpush2.xpose.msra.mxu0 0.0
        %1145 = vmatprep.subr.mxu0 0.0
        %1146 = vmatpush2.xpose.msra.mxu0 0.0
        %1147 = vmatprep.subr.mxu0 0.0
        %1148 = vmatpush2.xpose.msra.mxu0 0.0
        %1149 = vmatprep.subr.mxu0 0.0
        %1150 = vmatpush2.xpose.msra.mxu0 0.0
        %1151 = vmatprep.subr.mxu0 0.0
        %1152 = vmatpush2.xpose.msra.mxu0 0.0
        %1153 = vmatprep.subr.mxu0 0.0
        %1154 = vmatpush2.xpose.msra.mxu0 0.0
        %1155 = vmatprep.subr.mxu0 0.0
        %1156 = vmatpush2.xpose.msra.mxu0 0.0
        %1157 = vmatprep.subr.mxu0 0.0
        %1158 = vmatpush2.xpose.msra.mxu0 0.0
        %1159 = vmatprep.subr.mxu0 0.0
        %1160 = vmatpush2.xpose.msra.mxu0 0.0
        %1161 = vmatprep.subr.mxu0 0.0
        %1162 = vmatpush2.xpose.msra.mxu0 0.0
        %1163 = vmatprep.mubr.f32.mxu0 0.0
        %1164 = vmatmul.mubr.f32.gmra.mxu0 %v1097
        %v1165 = vpop.f32.mrf.mxu0
        %v1166 = vadd.f32 0.0, %v1165
        %v1167 = vpop.f32.mrf.mxu0
        %1168 = vdwg.mxu0
        %1170 = vset.pattern.permute.xlu0 16
        %1171 = vperm.xlu0 %1170, %v1088
        %v1172 = vpop.permute.xlu0 %1171
        %1175 = vset.pattern.permute.xlu0 16
        %1176 = vperm.xlu0 %1175, %v1093
        %v1177 = vpop.permute.xlu0 %1176
        %v1179 = vlaneseq
        %v1180 = vshrl.u32 %v1179, 7
        %v1181 = vsub.s32 0, %v1180
        %v1182 = vrot.slane %v1166, %v1181
        %v1183 = vadd.f32 %v1172, %v1182
        %v1184 = vadd.f32 %v1177, %v1182
        %vm1185 = vcmp.gt.f32.partialorder %v1183, 0.0
        %vm1186 = vcmp.gt.f32.partialorder %v1184, 0.0
        %v1187 = vmul.f32 %v1183, 0.2
        %v1188 = vmul.f32 %v1184, 0.2
        %v1189 = vsel %vm1185, %v1183, %v1187
        %v1190 = vsel %vm1186, %v1184, %v1188
        %v1191 = vadd.f32 %v1189, %v557
        %v1192 = vadd.f32 %v1190, %v558
        %v1193 = vsel %vm747, %v1191, -inf
        %1194 = vmax.xlane.f32.xlu0 %v1193
        %v1195 = vpop.xlane.xlu0 %1194
        %v1196 = vsel %vm747, %v1192, -inf
        %1197 = vmax.xlane.f32.xlu0 %v1196
        %v1198 = vpop.xlane.xlu0 %1197
        %v1199 = vsub.f32 %v1191, %v1195
        %v1200 = vsub.f32 %v1192, %v1198
        %v1201 = vmul.f32 %v1199, 1.442695
        %v1202 = vpow.pop %v1201
        %v1203 = vmul.f32 %v1200, 1.442695
        %v1204 = vpow.pop %v1203
        %v1205 = vsel %vm747, %v1202, 0.0
        %1206 = vadd.xlane.f32.xlu0 %v1205
        %v1207 = vpop.xlane.xlu0 %1206
        %v1208 = vsel %vm747, %v1204, 0.0
        %1209 = vadd.xlane.f32.xlu0 %v1208
        %v1210 = vpop.xlane.xlu0 %1209
        %v1212 = vsel %vm747, %v1202, 0
        %v1215 = vsel %vm747, %v1204, 0
        %1217 = vmatprep.subr.mxu0 0.0
        %1218 = vmatpush1.msra.mxu0 0.0
        %1219 = vmatprep.subr.mxu0 0.0
        %1220 = vmatpush1.msra.mxu0 0.0
        %1221 = vmatprep.subr.mxu0 0.0
        %1222 = vmatpush1.msra.mxu0 0.0
        %1223 = vmatprep.subr.mxu0 0.0
        %1224 = vmatpush1.msra.mxu0 0.0
        %1225 = vmatprep.subr.mxu0 0.0
        %1226 = vmatpush1.msra.mxu0 0.0
        %1227 = vmatprep.subr.mxu0 0.0
        %1228 = vmatpush1.msra.mxu0 0.0
        %1229 = vmatprep.subr.mxu0 0.0
        %1230 = vmatpush1.msra.mxu0 0.0
        %1231 = vmatprep.subr.mxu0 0.0
        %1232 = vmatpush1.msra.mxu0 0.0
        %1233 = vmatprep.subr.mxu0 0.0
        %1234 = vmatpush1.msra.mxu0 0.0
        %1235 = vmatprep.subr.mxu0 0.0
        %1236 = vmatpush1.msra.mxu0 0.0
        %1237 = vmatprep.subr.mxu0 0.0
        %1238 = vmatpush1.msra.mxu0 0.0
        %1239 = vmatprep.subr.mxu0 0.0
        %1240 = vmatpush1.msra.mxu0 0.0
        %1241 = vmatprep.subr.mxu0 0.0
        %1242 = vmatpush1.msra.mxu0 0.0
        %1243 = vmatprep.subr.mxu0 0.0
        %1244 = vmatpush1.msra.mxu0 0.0
        %1245 = vmatprep.subr.mxu0 0.0
        %1246 = vmatpush1.msra.mxu0 %v1093
        %1247 = vmatprep.subr.mxu0 0.0
        %1248 = vmatpush1.msra.mxu0 %v1088
        %1249 = vmatprep.subr.mxu0 0.0
        %1250 = vmatpush2.msra.mxu0 0.0
        %1251 = vmatprep.subr.mxu0 0.0
        %1252 = vmatpush2.msra.mxu0 0.0
        %1253 = vmatprep.subr.mxu0 0.0
        %1254 = vmatpush2.msra.mxu0 0.0
        %1255 = vmatprep.subr.mxu0 0.0
        %1256 = vmatpush2.msra.mxu0 0.0
        %1257 = vmatprep.subr.mxu0 0.0
        %1258 = vmatpush2.msra.mxu0 0.0
        %1259 = vmatprep.subr.mxu0 0.0
        %1260 = vmatpush2.msra.mxu0 0.0
        %1261 = vmatprep.subr.mxu0 0.0
        %1262 = vmatpush2.msra.mxu0 0.0
        %1263 = vmatprep.subr.mxu0 0.0
        %1264 = vmatpush2.msra.mxu0 0.0
        %1265 = vmatprep.subr.mxu0 0.0
        %1266 = vmatpush2.msra.mxu0 0.0
        %1267 = vmatprep.subr.mxu0 0.0
        %1268 = vmatpush2.msra.mxu0 0.0
        %1269 = vmatprep.subr.mxu0 0.0
        %1270 = vmatpush2.msra.mxu0 0.0
        %1271 = vmatprep.subr.mxu0 0.0
        %1272 = vmatpush2.msra.mxu0 0.0
        %1273 = vmatprep.subr.mxu0 0.0
        %1274 = vmatpush2.msra.mxu0 0.0
        %1275 = vmatprep.subr.mxu0 0.0
        %1276 = vmatpush2.msra.mxu0 0.0
        %1277 = vmatprep.subr.mxu0 0.0
        %1278 = vmatpush2.msra.mxu0 0.0
        %1279 = vmatprep.subr.mxu0 0.0
        %1280 = vmatpush2.msra.mxu0 0.0
        %1281 = vmatprep.mubr.f32.mxu0 0.0
        %1282 = vmatmul.mubr.f32.gmra.mxu0 %v1212
        %v1283 = vpop.f32.mrf.mxu0
        %v1284 = vadd.f32 0.0, %v1283
        %v1285 = vpop.f32.mrf.mxu0
        %1286 = vmatprep.mubr.f32.mxu0 0.0
        %1287 = vmatmul.mubr.f32.gmra.mxu0 %v1215
        %v1288 = vpop.f32.mrf.mxu0
        %v1289 = vadd.f32 0.0, %v1288
        %v1290 = vpop.f32.mrf.mxu0
        %1291 = vdwg.mxu0
        %v1292 = vrcp.pop %v1207
        %v1293 = vrcp.pop %v1210
        %v1294 = vmul.f32 %v1284, %v1292
        %v1295 = vmul.f32 %v1289, %v1293
        %1296 = vset.pattern.permute.xlu0 17
        %1297 = vperm.xlu0 %1296, %v1088
        %v1298 = vpop.permute.xlu0 %1297
        %1300 = vset.pattern.permute.xlu0 17
        %1301 = vperm.xlu0 %1300, %v1093
        %v1302 = vpop.permute.xlu0 %1301
        %v1304 = vlaneseq
        %v1305 = vshrl.u32 %v1304, 7
        %v1306 = vsub.s32 1, %v1305
        %v1307 = vrot.slane %v1166, %v1306
        %v1308 = vadd.f32 %v1298, %v1307
        %v1309 = vadd.f32 %v1302, %v1307
        %vm1310 = vcmp.gt.f32.partialorder %v1308, 0.0
        %vm1311 = vcmp.gt.f32.partialorder %v1309, 0.0
        %v1312 = vmul.f32 %v1308, 0.2
        %v1313 = vmul.f32 %v1309, 0.2
        %v1314 = vsel %vm1310, %v1308, %v1312
        %v1315 = vsel %vm1311, %v1309, %v1313
        %v1316 = vadd.f32 %v1314, %v557
        %v1317 = vadd.f32 %v1315, %v558
        %v1318 = vsel %vm747, %v1316, -inf
        %1319 = vmax.xlane.f32.xlu0 %v1318
        %v1320 = vpop.xlane.xlu0 %1319
        %v1321 = vsel %vm747, %v1317, -inf
        %1322 = vmax.xlane.f32.xlu0 %v1321
        %v1323 = vpop.xlane.xlu0 %1322
        %v1324 = vsub.f32 %v1316, %v1320
        %v1325 = vsub.f32 %v1317, %v1323
        %v1326 = vmul.f32 %v1324, 1.442695
        %v1327 = vpow.pop %v1326
        %v1328 = vmul.f32 %v1325, 1.442695
        %v1329 = vpow.pop %v1328
        %v1330 = vsel %vm747, %v1327, 0.0
        %1331 = vadd.xlane.f32.xlu0 %v1330
        %v1332 = vpop.xlane.xlu0 %1331
        %v1333 = vsel %vm747, %v1329, 0.0
        %1334 = vadd.xlane.f32.xlu0 %v1333
        %v1335 = vpop.xlane.xlu0 %1334
        %1336 = vrot.lane.b32.xlu0 %v1088, 120
        %v1337 = vpop.permute.xlu0 %1336
        %1338 = vrot.lane.b32.xlu0 %v1093, 120
        %v1339 = vpop.permute.xlu0 %1338
        %v1343 = vsel %vm747, %v1327, 0
        %v1346 = vsel %vm747, %v1329, 0
        %1348 = vmatprep.subr.mxu0 0.0
        %1349 = vmatpush1.msra.mxu0 0.0
        %1350 = vmatprep.subr.mxu0 0.0
        %1351 = vmatpush1.msra.mxu0 0.0
        %1352 = vmatprep.subr.mxu0 0.0
        %1353 = vmatpush1.msra.mxu0 0.0
        %1354 = vmatprep.subr.mxu0 0.0
        %1355 = vmatpush1.msra.mxu0 0.0
        %1356 = vmatprep.subr.mxu0 0.0
        %1357 = vmatpush1.msra.mxu0 0.0
        %1358 = vmatprep.subr.mxu0 0.0
        %1359 = vmatpush1.msra.mxu0 0.0
        %1360 = vmatprep.subr.mxu0 0.0
        %1361 = vmatpush1.msra.mxu0 0.0
        %1362 = vmatprep.subr.mxu0 0.0
        %1363 = vmatpush1.msra.mxu0 0.0
        %1364 = vmatprep.subr.mxu0 0.0
        %1365 = vmatpush1.msra.mxu0 0.0
        %1366 = vmatprep.subr.mxu0 0.0
        %1367 = vmatpush1.msra.mxu0 0.0
        %1368 = vmatprep.subr.mxu0 0.0
        %1369 = vmatpush1.msra.mxu0 0.0
        %1370 = vmatprep.subr.mxu0 0.0
        %1371 = vmatpush1.msra.mxu0 0.0
        %1372 = vmatprep.subr.mxu0 0.0
        %1373 = vmatpush1.msra.mxu0 0.0
        %1374 = vmatprep.subr.mxu0 0.0
        %1375 = vmatpush1.msra.mxu0 0.0
        %1376 = vmatprep.subr.mxu0 0.0
        %1377 = vmatpush1.msra.mxu0 %v1339
        %1378 = vmatprep.subr.mxu0 0.0
        %1379 = vmatpush1.msra.mxu0 %v1337
        %1380 = vmatprep.subr.mxu0 0.0
        %1381 = vmatpush2.msra.mxu0 0.0
        %1382 = vmatprep.subr.mxu0 0.0
        %1383 = vmatpush2.msra.mxu0 0.0
        %1384 = vmatprep.subr.mxu0 0.0
        %1385 = vmatpush2.msra.mxu0 0.0
        %1386 = vmatprep.subr.mxu0 0.0
        %1387 = vmatpush2.msra.mxu0 0.0
        %1388 = vmatprep.subr.mxu0 0.0
        %1389 = vmatpush2.msra.mxu0 0.0
        %1390 = vmatprep.subr.mxu0 0.0
        %1391 = vmatpush2.msra.mxu0 0.0
        %1392 = vmatprep.subr.mxu0 0.0
        %1393 = vmatpush2.msra.mxu0 0.0
        %1394 = vmatprep.subr.mxu0 0.0
        %1395 = vmatpush2.msra.mxu0 0.0
        %1396 = vmatprep.subr.mxu0 0.0
        %1397 = vmatpush2.msra.mxu0 0.0
        %1398 = vmatprep.subr.mxu0 0.0
        %1399 = vmatpush2.msra.mxu0 0.0
        %1400 = vmatprep.subr.mxu0 0.0
        %1401 = vmatpush2.msra.mxu0 0.0
        %1402 = vmatprep.subr.mxu0 0.0
        %1403 = vmatpush2.msra.mxu0 0.0
        %1404 = vmatprep.subr.mxu0 0.0
        %1405 = vmatpush2.msra.mxu0 0.0
        %1406 = vmatprep.subr.mxu0 0.0
        %1407 = vmatpush2.msra.mxu0 0.0
        %1408 = vmatprep.subr.mxu0 0.0
        %1409 = vmatpush2.msra.mxu0 0.0
        %1410 = vmatprep.subr.mxu0 0.0
        %1411 = vmatpush2.msra.mxu0 0.0
        %1412 = vmatprep.mubr.f32.mxu0 0.0
        %1413 = vmatmul.mubr.f32.gmra.mxu0 %v1343
        %v1414 = vpop.f32.mrf.mxu0
        %v1415 = vadd.f32 0.0, %v1414
        %v1416 = vpop.f32.mrf.mxu0
        %1417 = vmatprep.mubr.f32.mxu0 0.0
        %1418 = vmatmul.mubr.f32.gmra.mxu0 %v1346
        %v1419 = vpop.f32.mrf.mxu0
        %v1420 = vadd.f32 0.0, %v1419
        %v1421 = vpop.f32.mrf.mxu0
        %1422 = vdwg.mxu0
        %v1423 = vrcp.pop %v1332
        %v1424 = vrcp.pop %v1335
        %v1425 = vmul.f32 %v1415, %v1423
        %v1426 = vmul.f32 %v1420, %v1424
        %1429 = vrot.lane.b32.xlu0 %v1425, 8
        %v1430 = vpop.permute.xlu0 %1429
        %1431 = vrot.lane.b32.xlu0 %v1426, 8
        %v1432 = vpop.permute.xlu0 %1431
        %v1435 = vsel %vm990, %v1294, %v1430
        %v1436 = vsel %vm990, %v1295, %v1432
        %v1438 = vlaneseq
        %v1439 = vshrl.u32 %v1438, 7
        %v1440 = vsub.s32 0, %v1439
        %v1441 = vrot.slane %v1014, %v1440
        %v1443 = vadd.f32 %v1435, %v1441
        %v1444 = vadd.f32 %v1436, %v1441
        %vm1445 = vcmp.gt.f32.partialorder %v1443, 0.0
        %vm1446 = vcmp.gt.f32.partialorder %v1444, 0.0
        %v1447 = vmul.f32 %v1443, 1.442695
        %v1448 = vpow.pop %v1447
        %v1449 = vmul.f32 %v1444, 1.442695
        %v1450 = vpow.pop %v1449
        %v1451 = vsub.f32 %v1448, 1.0
        %v1452 = vsub.f32 %v1450, 1.0
        %v1453 = vsel %vm1445, %v1443, %v1451
        %v1454 = vsel %vm1446, %v1444, %v1452
        %v1455 = vld [vmem:[%s8] sm:$0xff]
        %v1456 = vld [vmem:[%s8 + $0x8] sm:$0xff]
        %v1457 = vld [vmem:[%s9] sm:$0x3]
        %v1458 = vld [vmem:[%s10] sm:$0x1]
        %v1460 = vsel %vm747, %v1453, 0
        %v1463 = vsel %vm747, %v1454, 0
        %1465 = vmatprep.subr.mxu0 0.0
        %1466 = vmatpush1.msra.mxu0 0.0
        %1467 = vmatprep.subr.mxu0 0.0
        %1468 = vmatpush1.msra.mxu0 0.0
        %1469 = vmatprep.subr.mxu0 0.0
        %1470 = vmatpush1.msra.mxu0 0.0
        %1471 = vmatprep.subr.mxu0 0.0
        %1472 = vmatpush1.msra.mxu0 0.0
        %1473 = vmatprep.subr.mxu0 0.0
        %1474 = vmatpush1.msra.mxu0 0.0
        %1475 = vmatprep.subr.mxu0 0.0
        %1476 = vmatpush1.msra.mxu0 0.0
        %1477 = vmatprep.subr.mxu0 0.0
        %1478 = vmatpush1.msra.mxu0 0.0
        %1479 = vmatprep.subr.mxu0 0.0
        %1480 = vmatpush1.msra.mxu0 0.0
        %1481 = vmatprep.subr.mxu0 0.0
        %1482 = vmatpush1.msra.mxu0 0.0
        %1483 = vmatprep.subr.mxu0 0.0
        %1484 = vmatpush1.msra.mxu0 0.0
        %1485 = vmatprep.subr.mxu0 0.0
        %1486 = vmatpush1.msra.mxu0 0.0
        %1487 = vmatprep.subr.mxu0 0.0
        %1488 = vmatpush1.msra.mxu0 0.0
        %1489 = vmatprep.subr.mxu0 0.0
        %1490 = vmatpush1.msra.mxu0 0.0
        %1491 = vmatprep.subr.mxu0 0.0
        %1492 = vmatpush1.msra.mxu0 0.0
        %1493 = vmatprep.subr.mxu0 0.0
        %1494 = vmatpush1.msra.mxu0 %v1456
        %1495 = vmatprep.subr.mxu0 0.0
        %1496 = vmatpush1.msra.mxu0 %v1455
        %1497 = vmatprep.subr.mxu0 0.0
        %1498 = vmatpush2.msra.mxu0 0.0
        %1499 = vmatprep.subr.mxu0 0.0
        %1500 = vmatpush2.msra.mxu0 0.0
        %1501 = vmatprep.subr.mxu0 0.0
        %1502 = vmatpush2.msra.mxu0 0.0
        %1503 = vmatprep.subr.mxu0 0.0
        %1504 = vmatpush2.msra.mxu0 0.0
        %1505 = vmatprep.subr.mxu0 0.0
        %1506 = vmatpush2.msra.mxu0 0.0
        %1507 = vmatprep.subr.mxu0 0.0
        %1508 = vmatpush2.msra.mxu0 0.0
        %1509 = vmatprep.subr.mxu0 0.0
        %1510 = vmatpush2.msra.mxu0 0.0
        %1511 = vmatprep.subr.mxu0 0.0
        %1512 = vmatpush2.msra.mxu0 0.0
        %1513 = vmatprep.subr.mxu0 0.0
        %1514 = vmatpush2.msra.mxu0 0.0
        %1515 = vmatprep.subr.mxu0 0.0
        %1516 = vmatpush2.msra.mxu0 0.0
        %1517 = vmatprep.subr.mxu0 0.0
        %1518 = vmatpush2.msra.mxu0 0.0
        %1519 = vmatprep.subr.mxu0 0.0
        %1520 = vmatpush2.msra.mxu0 0.0
        %1521 = vmatprep.subr.mxu0 0.0
        %1522 = vmatpush2.msra.mxu0 0.0
        %1523 = vmatprep.subr.mxu0 0.0
        %1524 = vmatpush2.msra.mxu0 0.0
        %1525 = vmatprep.subr.mxu0 0.0
        %1526 = vmatpush2.msra.mxu0 0.0
        %1527 = vmatprep.subr.mxu0 0.0
        %1528 = vmatpush2.msra.mxu0 0.0
        %1529 = vmatprep.mubr.f32.mxu0 0.0
        %1530 = vmatmul.mubr.f32.gmra.mxu0 %v1460
        %v1531 = vpop.f32.mrf.mxu0
        %v1532 = vadd.f32 0.0, %v1531
        %v1533 = vpop.f32.mrf.mxu0
        %1534 = vmatprep.mubr.f32.mxu0 0.0
        %1535 = vmatmul.mubr.f32.gmra.mxu0 %v1463
        %v1536 = vpop.f32.mrf.mxu0
        %v1537 = vadd.f32 0.0, %v1536
        %v1538 = vpop.f32.mrf.mxu0
        %1539 = vdwg.mxu0
        %v1541 = vsel %vm747, %v1457, 0
        %1543 = vmatprep.subr.mxu0 0.0
        %1544 = vmatpush1.xpose.msra.mxu0 0.0
        %1545 = vmatprep.subr.mxu0 0.0
        %1546 = vmatpush1.xpose.msra.mxu0 0.0
        %1547 = vmatprep.subr.mxu0 0.0
        %1548 = vmatpush1.xpose.msra.mxu0 0.0
        %1549 = vmatprep.subr.mxu0 0.0
        %1550 = vmatpush1.xpose.msra.mxu0 0.0
        %1551 = vmatprep.subr.mxu0 0.0
        %1552 = vmatpush1.xpose.msra.mxu0 0.0
        %1553 = vmatprep.subr.mxu0 0.0
        %1554 = vmatpush1.xpose.msra.mxu0 0.0
        %1555 = vmatprep.subr.mxu0 0.0
        %1556 = vmatpush1.xpose.msra.mxu0 0.0
        %1557 = vmatprep.subr.mxu0 0.0
        %1558 = vmatpush1.xpose.msra.mxu0 0.0
        %1559 = vmatprep.subr.mxu0 0.0
        %1560 = vmatpush1.xpose.msra.mxu0 0.0
        %1561 = vmatprep.subr.mxu0 0.0
        %1562 = vmatpush1.xpose.msra.mxu0 0.0
        %1563 = vmatprep.subr.mxu0 0.0
        %1564 = vmatpush1.xpose.msra.mxu0 0.0
        %1565 = vmatprep.subr.mxu0 0.0
        %1566 = vmatpush1.xpose.msra.mxu0 0.0
        %1567 = vmatprep.subr.mxu0 0.0
        %1568 = vmatpush1.xpose.msra.mxu0 0.0
        %1569 = vmatprep.subr.mxu0 0.0
        %1570 = vmatpush1.xpose.msra.mxu0 0.0
        %1571 = vmatprep.subr.mxu0 0.0
        %1572 = vmatpush1.xpose.msra.mxu0 %v1463
        %1573 = vmatprep.subr.mxu0 0.0
        %1574 = vmatpush1.xpose.msra.mxu0 %v1460
        %1575 = vmatprep.subr.mxu0 0.0
        %1576 = vmatpush2.xpose.msra.mxu0 0.0
        %1577 = vmatprep.subr.mxu0 0.0
        %1578 = vmatpush2.xpose.msra.mxu0 0.0
        %1579 = vmatprep.subr.mxu0 0.0
        %1580 = vmatpush2.xpose.msra.mxu0 0.0
        %1581 = vmatprep.subr.mxu0 0.0
        %1582 = vmatpush2.xpose.msra.mxu0 0.0
        %1583 = vmatprep.subr.mxu0 0.0
        %1584 = vmatpush2.xpose.msra.mxu0 0.0
        %1585 = vmatprep.subr.mxu0 0.0
        %1586 = vmatpush2.xpose.msra.mxu0 0.0
        %1587 = vmatprep.subr.mxu0 0.0
        %1588 = vmatpush2.xpose.msra.mxu0 0.0
        %1589 = vmatprep.subr.mxu0 0.0
        %1590 = vmatpush2.xpose.msra.mxu0 0.0
        %1591 = vmatprep.subr.mxu0 0.0
        %1592 = vmatpush2.xpose.msra.mxu0 0.0
        %1593 = vmatprep.subr.mxu0 0.0
        %1594 = vmatpush2.xpose.msra.mxu0 0.0
        %1595 = vmatprep.subr.mxu0 0.0
        %1596 = vmatpush2.xpose.msra.mxu0 0.0
        %1597 = vmatprep.subr.mxu0 0.0
        %1598 = vmatpush2.xpose.msra.mxu0 0.0
        %1599 = vmatprep.subr.mxu0 0.0
        %1600 = vmatpush2.xpose.msra.mxu0 0.0
        %1601 = vmatprep.subr.mxu0 0.0
        %1602 = vmatpush2.xpose.msra.mxu0 0.0
        %1603 = vmatprep.subr.mxu0 0.0
        %1604 = vmatpush2.xpose.msra.mxu0 0.0
        %1605 = vmatprep.subr.mxu0 0.0
        %1606 = vmatpush2.xpose.msra.mxu0 0.0
        %1607 = vmatprep.mubr.f32.mxu0 0.0
        %1608 = vmatmul.mubr.f32.gmra.mxu0 %v1541
        %v1609 = vpop.f32.mrf.mxu0
        %v1610 = vadd.f32 0.0, %v1609
        %v1611 = vpop.f32.mrf.mxu0
        %1612 = vdwg.mxu0
        %1614 = vset.pattern.permute.xlu0 16
        %1615 = vperm.xlu0 %1614, %v1532
        %v1616 = vpop.permute.xlu0 %1615
        %1619 = vset.pattern.permute.xlu0 16
        %1620 = vperm.xlu0 %1619, %v1537
        %v1621 = vpop.permute.xlu0 %1620
        %v1623 = vlaneseq
        %v1624 = vshrl.u32 %v1623, 7
        %v1625 = vsub.s32 0, %v1624
        %v1626 = vrot.slane %v1610, %v1625
        %v1627 = vadd.f32 %v1616, %v1626
        %v1628 = vadd.f32 %v1621, %v1626
        %vm1629 = vcmp.gt.f32.partialorder %v1627, 0.0
        %vm1630 = vcmp.gt.f32.partialorder %v1628, 0.0
        %v1631 = vmul.f32 %v1627, 0.2
        %v1632 = vmul.f32 %v1628, 0.2
        %v1633 = vsel %vm1629, %v1627, %v1631
        %v1634 = vsel %vm1630, %v1628, %v1632
        %v1635 = vadd.f32 %v1633, %v557
        %v1636 = vadd.f32 %v1634, %v558
        %v1637 = vsel %vm747, %v1635, -inf
        %1638 = vmax.xlane.f32.xlu0 %v1637
        %v1639 = vpop.xlane.xlu0 %1638
        %v1640 = vsel %vm747, %v1636, -inf
        %1641 = vmax.xlane.f32.xlu0 %v1640
        %v1642 = vpop.xlane.xlu0 %1641
        %v1643 = vsub.f32 %v1635, %v1639
        %v1644 = vsub.f32 %v1636, %v1642
        %v1645 = vmul.f32 %v1643, 1.442695
        %v1646 = vpow.pop %v1645
        %v1647 = vmul.f32 %v1644, 1.442695
        %v1648 = vpow.pop %v1647
        %v1649 = vsel %vm747, %v1646, 0.0
        %1650 = vadd.xlane.f32.xlu0 %v1649
        %v1651 = vpop.xlane.xlu0 %1650
        %v1652 = vsel %vm747, %v1648, 0.0
        %1653 = vadd.xlane.f32.xlu0 %v1652
        %v1654 = vpop.xlane.xlu0 %1653
        %v1656 = vsel %vm747, %v1646, 0
        %v1659 = vsel %vm747, %v1648, 0
        %1661 = vmatprep.subr.mxu0 0.0
        %1662 = vmatpush1.msra.mxu0 0.0
        %1663 = vmatprep.subr.mxu0 0.0
        %1664 = vmatpush1.msra.mxu0 0.0
        %1665 = vmatprep.subr.mxu0 0.0
        %1666 = vmatpush1.msra.mxu0 0.0
        %1667 = vmatprep.subr.mxu0 0.0
        %1668 = vmatpush1.msra.mxu0 0.0
        %1669 = vmatprep.subr.mxu0 0.0
        %1670 = vmatpush1.msra.mxu0 0.0
        %1671 = vmatprep.subr.mxu0 0.0
        %1672 = vmatpush1.msra.mxu0 0.0
        %1673 = vmatprep.subr.mxu0 0.0
        %1674 = vmatpush1.msra.mxu0 0.0
        %1675 = vmatprep.subr.mxu0 0.0
        %1676 = vmatpush1.msra.mxu0 0.0
        %1677 = vmatprep.subr.mxu0 0.0
        %1678 = vmatpush1.msra.mxu0 0.0
        %1679 = vmatprep.subr.mxu0 0.0
        %1680 = vmatpush1.msra.mxu0 0.0
        %1681 = vmatprep.subr.mxu0 0.0
        %1682 = vmatpush1.msra.mxu0 0.0
        %1683 = vmatprep.subr.mxu0 0.0
        %1684 = vmatpush1.msra.mxu0 0.0
        %1685 = vmatprep.subr.mxu0 0.0
        %1686 = vmatpush1.msra.mxu0 0.0
        %1687 = vmatprep.subr.mxu0 0.0
        %1688 = vmatpush1.msra.mxu0 0.0
        %1689 = vmatprep.subr.mxu0 0.0
        %1690 = vmatpush1.msra.mxu0 %v1537
        %1691 = vmatprep.subr.mxu0 0.0
        %1692 = vmatpush1.msra.mxu0 %v1532
        %1693 = vmatprep.subr.mxu0 0.0
        %1694 = vmatpush2.msra.mxu0 0.0
        %1695 = vmatprep.subr.mxu0 0.0
        %1696 = vmatpush2.msra.mxu0 0.0
        %1697 = vmatprep.subr.mxu0 0.0
        %1698 = vmatpush2.msra.mxu0 0.0
        %1699 = vmatprep.subr.mxu0 0.0
        %1700 = vmatpush2.msra.mxu0 0.0
        %1701 = vmatprep.subr.mxu0 0.0
        %1702 = vmatpush2.msra.mxu0 0.0
        %1703 = vmatprep.subr.mxu0 0.0
        %1704 = vmatpush2.msra.mxu0 0.0
        %1705 = vmatprep.subr.mxu0 0.0
        %1706 = vmatpush2.msra.mxu0 0.0
        %1707 = vmatprep.subr.mxu0 0.0
        %1708 = vmatpush2.msra.mxu0 0.0
        %1709 = vmatprep.subr.mxu0 0.0
        %1710 = vmatpush2.msra.mxu0 0.0
        %1711 = vmatprep.subr.mxu0 0.0
        %1712 = vmatpush2.msra.mxu0 0.0
        %1713 = vmatprep.subr.mxu0 0.0
        %1714 = vmatpush2.msra.mxu0 0.0
        %1715 = vmatprep.subr.mxu0 0.0
        %1716 = vmatpush2.msra.mxu0 0.0
        %1717 = vmatprep.subr.mxu0 0.0
        %1718 = vmatpush2.msra.mxu0 0.0
        %1719 = vmatprep.subr.mxu0 0.0
        %1720 = vmatpush2.msra.mxu0 0.0
        %1721 = vmatprep.subr.mxu0 0.0
        %1722 = vmatpush2.msra.mxu0 0.0
        %1723 = vmatprep.subr.mxu0 0.0
        %1724 = vmatpush2.msra.mxu0 0.0
        %1725 = vmatprep.mubr.f32.mxu0 0.0
        %1726 = vmatmul.mubr.f32.gmra.mxu0 %v1656
        %v1727 = vpop.f32.mrf.mxu0
        %v1728 = vadd.f32 0.0, %v1727
        %v1729 = vpop.f32.mrf.mxu0
        %1730 = vmatprep.mubr.f32.mxu0 0.0
        %1731 = vmatmul.mubr.f32.gmra.mxu0 %v1659
        %v1732 = vpop.f32.mrf.mxu0
        %v1733 = vadd.f32 0.0, %v1732
        %v1734 = vpop.f32.mrf.mxu0
        %1735 = vdwg.mxu0
        %v1736 = vrcp.pop %v1651
        %v1737 = vrcp.pop %v1654
        %v1738 = vmul.f32 %v1728, %v1736
        %v1739 = vmul.f32 %v1733, %v1737
        %1740 = vset.pattern.permute.xlu0 17
        %1741 = vperm.xlu0 %1740, %v1532
        %v1742 = vpop.permute.xlu0 %1741
        %1744 = vset.pattern.permute.xlu0 17
        %1745 = vperm.xlu0 %1744, %v1537
        %v1746 = vpop.permute.xlu0 %1745
        %v1748 = vlaneseq
        %v1749 = vshrl.u32 %v1748, 7
        %v1750 = vsub.s32 1, %v1749
        %v1751 = vrot.slane %v1610, %v1750
        %v1752 = vadd.f32 %v1742, %v1751
        %v1753 = vadd.f32 %v1746, %v1751
        %vm1754 = vcmp.gt.f32.partialorder %v1752, 0.0
        %vm1755 = vcmp.gt.f32.partialorder %v1753, 0.0
        %v1756 = vmul.f32 %v1752, 0.2
        %v1757 = vmul.f32 %v1753, 0.2
        %v1758 = vsel %vm1754, %v1752, %v1756
        %v1759 = vsel %vm1755, %v1753, %v1757
        %v1760 = vadd.f32 %v1758, %v557
        %v1761 = vadd.f32 %v1759, %v558
        %v1762 = vsel %vm747, %v1760, -inf
        %1763 = vmax.xlane.f32.xlu0 %v1762
        %v1764 = vpop.xlane.xlu0 %1763
        %v1765 = vsel %vm747, %v1761, -inf
        %1766 = vmax.xlane.f32.xlu0 %v1765
        %v1767 = vpop.xlane.xlu0 %1766
        %v1768 = vsub.f32 %v1760, %v1764
        %v1769 = vsub.f32 %v1761, %v1767
        %v1770 = vmul.f32 %v1768, 1.442695
        %v1771 = vpow.pop %v1770
        %v1772 = vmul.f32 %v1769, 1.442695
        %v1773 = vpow.pop %v1772
        %v1774 = vsel %vm747, %v1771, 0.0
        %1775 = vadd.xlane.f32.xlu0 %v1774
        %v1776 = vpop.xlane.xlu0 %1775
        %v1777 = vsel %vm747, %v1773, 0.0
        %1778 = vadd.xlane.f32.xlu0 %v1777
        %v1779 = vpop.xlane.xlu0 %1778
        %1780 = vrot.lane.b32.xlu0 %v1532, 120
        %v1781 = vpop.permute.xlu0 %1780
        %1782 = vrot.lane.b32.xlu0 %v1537, 120
        %v1783 = vpop.permute.xlu0 %1782
        %v1787 = vsel %vm747, %v1771, 0
        %v1790 = vsel %vm747, %v1773, 0
        %1792 = vmatprep.subr.mxu0 0.0
        %1793 = vmatpush1.msra.mxu0 0.0
        %1794 = vmatprep.subr.mxu0 0.0
        %1795 = vmatpush1.msra.mxu0 0.0
        %1796 = vmatprep.subr.mxu0 0.0
        %1797 = vmatpush1.msra.mxu0 0.0
        %1798 = vmatprep.subr.mxu0 0.0
        %1799 = vmatpush1.msra.mxu0 0.0
        %1800 = vmatprep.subr.mxu0 0.0
        %1801 = vmatpush1.msra.mxu0 0.0
        %1802 = vmatprep.subr.mxu0 0.0
        %1803 = vmatpush1.msra.mxu0 0.0
        %1804 = vmatprep.subr.mxu0 0.0
        %1805 = vmatpush1.msra.mxu0 0.0
        %1806 = vmatprep.subr.mxu0 0.0
        %1807 = vmatpush1.msra.mxu0 0.0
        %1808 = vmatprep.subr.mxu0 0.0
        %1809 = vmatpush1.msra.mxu0 0.0
        %1810 = vmatprep.subr.mxu0 0.0
        %1811 = vmatpush1.msra.mxu0 0.0
        %1812 = vmatprep.subr.mxu0 0.0
        %1813 = vmatpush1.msra.mxu0 0.0
        %1814 = vmatprep.subr.mxu0 0.0
        %1815 = vmatpush1.msra.mxu0 0.0
        %1816 = vmatprep.subr.mxu0 0.0
        %1817 = vmatpush1.msra.mxu0 0.0
        %1818 = vmatprep.subr.mxu0 0.0
        %1819 = vmatpush1.msra.mxu0 0.0
        %1820 = vmatprep.subr.mxu0 0.0
        %1821 = vmatpush1.msra.mxu0 %v1783
        %1822 = vmatprep.subr.mxu0 0.0
        %1823 = vmatpush1.msra.mxu0 %v1781
        %1824 = vmatprep.subr.mxu0 0.0
        %1825 = vmatpush2.msra.mxu0 0.0
        %1826 = vmatprep.subr.mxu0 0.0
        %1827 = vmatpush2.msra.mxu0 0.0
        %1828 = vmatprep.subr.mxu0 0.0
        %1829 = vmatpush2.msra.mxu0 0.0
        %1830 = vmatprep.subr.mxu0 0.0
        %1831 = vmatpush2.msra.mxu0 0.0
        %1832 = vmatprep.subr.mxu0 0.0
        %1833 = vmatpush2.msra.mxu0 0.0
        %1834 = vmatprep.subr.mxu0 0.0
        %1835 = vmatpush2.msra.mxu0 0.0
        %1836 = vmatprep.subr.mxu0 0.0
        %1837 = vmatpush2.msra.mxu0 0.0
        %1838 = vmatprep.subr.mxu0 0.0
        %1839 = vmatpush2.msra.mxu0 0.0
        %1840 = vmatprep.subr.mxu0 0.0
        %1841 = vmatpush2.msra.mxu0 0.0
        %1842 = vmatprep.subr.mxu0 0.0
        %1843 = vmatpush2.msra.mxu0 0.0
        %1844 = vmatprep.subr.mxu0 0.0
        %1845 = vmatpush2.msra.mxu0 0.0
        %1846 = vmatprep.subr.mxu0 0.0
        %1847 = vmatpush2.msra.mxu0 0.0
        %1848 = vmatprep.subr.mxu0 0.0
        %1849 = vmatpush2.msra.mxu0 0.0
        %1850 = vmatprep.subr.mxu0 0.0
        %1851 = vmatpush2.msra.mxu0 0.0
        %1852 = vmatprep.subr.mxu0 0.0
        %1853 = vmatpush2.msra.mxu0 0.0
        %1854 = vmatprep.subr.mxu0 0.0
        %1855 = vmatpush2.msra.mxu0 0.0
        %1856 = vmatprep.mubr.f32.mxu0 0.0
        %1857 = vmatmul.mubr.f32.gmra.mxu0 %v1787
        %v1858 = vpop.f32.mrf.mxu0
        %v1859 = vadd.f32 0.0, %v1858
        %v1860 = vpop.f32.mrf.mxu0
        %1861 = vmatprep.mubr.f32.mxu0 0.0
        %1862 = vmatmul.mubr.f32.gmra.mxu0 %v1790
        %v1863 = vpop.f32.mrf.mxu0
        %v1864 = vadd.f32 0.0, %v1863
        %v1865 = vpop.f32.mrf.mxu0
        %1866 = vdwg.mxu0
        %v1867 = vrcp.pop %v1776
        %v1868 = vrcp.pop %v1779
        %v1869 = vmul.f32 %v1859, %v1867
        %v1870 = vmul.f32 %v1864, %v1868
        %v1871 = vadd.f32 %v1738, %v1869
        %v1872 = vadd.f32 %v1739, %v1870
        %v1873 = vmul.f32 %v1871, 0.5
        %v1874 = vmul.f32 %v1872, 0.5
        %v1876 = vlaneseq
        %v1877 = vshrl.u32 %v1876, 7
        %v1878 = vsub.s32 0, %v1877
        %v1879 = vrot.slane %v1458, %v1878
        %v1881 = vadd.f32 %v1873, %v1879
        %v1882 = vadd.f32 %v1874, %v1879
        %v1884 = vsel %vm747, 0.0625, 0
        %1886 = vmatprep.subr.mxu0 0.0
        %1887 = vmatpush1.msra.mxu0 0.0
        %1888 = vmatprep.subr.mxu0 0.0
        %1889 = vmatpush1.msra.mxu0 0.0
        %1890 = vmatprep.subr.mxu0 0.0
        %1891 = vmatpush1.msra.mxu0 0.0
        %1892 = vmatprep.subr.mxu0 0.0
        %1893 = vmatpush1.msra.mxu0 0.0
        %1894 = vmatprep.subr.mxu0 0.0
        %1895 = vmatpush1.msra.mxu0 0.0
        %1896 = vmatprep.subr.mxu0 0.0
        %1897 = vmatpush1.msra.mxu0 0.0
        %1898 = vmatprep.subr.mxu0 0.0
        %1899 = vmatpush1.msra.mxu0 0.0
        %1900 = vmatprep.subr.mxu0 0.0
        %1901 = vmatpush1.msra.mxu0 0.0
        %1902 = vmatprep.subr.mxu0 0.0
        %1903 = vmatpush1.msra.mxu0 0.0
        %1904 = vmatprep.subr.mxu0 0.0
        %1905 = vmatpush1.msra.mxu0 0.0
        %1906 = vmatprep.subr.mxu0 0.0
        %1907 = vmatpush1.msra.mxu0 0.0
        %1908 = vmatprep.subr.mxu0 0.0
        %1909 = vmatpush1.msra.mxu0 0.0
        %1910 = vmatprep.subr.mxu0 0.0
        %1911 = vmatpush1.msra.mxu0 0.0
        %1912 = vmatprep.subr.mxu0 0.0
        %1913 = vmatpush1.msra.mxu0 0.0
        %1914 = vmatprep.subr.mxu0 0.0
        %1915 = vmatpush1.msra.mxu0 %v1882
        %1916 = vmatprep.subr.mxu0 0.0
        %1917 = vmatpush1.msra.mxu0 %v1881
        %1918 = vmatprep.subr.mxu0 0.0
        %1919 = vmatpush2.msra.mxu0 0.0
        %1920 = vmatprep.subr.mxu0 0.0
        %1921 = vmatpush2.msra.mxu0 0.0
        %1922 = vmatprep.subr.mxu0 0.0
        %1923 = vmatpush2.msra.mxu0 0.0
        %1924 = vmatprep.subr.mxu0 0.0
        %1925 = vmatpush2.msra.mxu0 0.0
        %1926 = vmatprep.subr.mxu0 0.0
        %1927 = vmatpush2.msra.mxu0 0.0
        %1928 = vmatprep.subr.mxu0 0.0
        %1929 = vmatpush2.msra.mxu0 0.0
        %1930 = vmatprep.subr.mxu0 0.0
        %1931 = vmatpush2.msra.mxu0 0.0
        %1932 = vmatprep.subr.mxu0 0.0
        %1933 = vmatpush2.msra.mxu0 0.0
        %1934 = vmatprep.subr.mxu0 0.0
        %1935 = vmatpush2.msra.mxu0 0.0
        %1936 = vmatprep.subr.mxu0 0.0
        %1937 = vmatpush2.msra.mxu0 0.0
        %1938 = vmatprep.subr.mxu0 0.0
        %1939 = vmatpush2.msra.mxu0 0.0
        %1940 = vmatprep.subr.mxu0 0.0
        %1941 = vmatpush2.msra.mxu0 0.0
        %1942 = vmatprep.subr.mxu0 0.0
        %1943 = vmatpush2.msra.mxu0 0.0
        %1944 = vmatprep.subr.mxu0 0.0
        %1945 = vmatpush2.msra.mxu0 0.0
        %1946 = vmatprep.subr.mxu0 0.0
        %1947 = vmatpush2.msra.mxu0 0.0
        %1948 = vmatprep.subr.mxu0 0.0
        %1949 = vmatpush2.msra.mxu0 0.0
        %1950 = vmatprep.mubr.f32.mxu0 0.0
        %1951 = vmatmul.mubr.f32.gmra.mxu0 %v1884
        %v1952 = vpop.f32.mrf.mxu0
        %v1953 = vadd.f32 0.0, %v1952
        %v1954 = vpop.f32.mrf.mxu0
        %1955 = vdwg.mxu0
        %v1956 = vld [vmem:[%s11] sm:$0xff]
        %v1957 = vld [vmem:[%s12] sm:$0x1]
        %v1959 = vsel %vm990, %v1953, 0
        %1961 = vmatprep.subr.mxu0 0.0
        %1962 = vmatpush1.msra.mxu0 0.0
        %1963 = vmatprep.subr.mxu0 0.0
        %1964 = vmatpush1.msra.mxu0 0.0
        %1965 = vmatprep.subr.mxu0 0.0
        %1966 = vmatpush1.msra.mxu0 0.0
        %1967 = vmatprep.subr.mxu0 0.0
        %1968 = vmatpush1.msra.mxu0 0.0
        %1969 = vmatprep.subr.mxu0 0.0
        %1970 = vmatpush1.msra.mxu0 0.0
        %1971 = vmatprep.subr.mxu0 0.0
        %1972 = vmatpush1.msra.mxu0 0.0
        %1973 = vmatprep.subr.mxu0 0.0
        %1974 = vmatpush1.msra.mxu0 0.0
        %1975 = vmatprep.subr.mxu0 0.0
        %1976 = vmatpush1.msra.mxu0 0.0
        %1977 = vmatprep.subr.mxu0 0.0
        %1978 = vmatpush1.msra.mxu0 0.0
        %1979 = vmatprep.subr.mxu0 0.0
        %1980 = vmatpush1.msra.mxu0 0.0
        %1981 = vmatprep.subr.mxu0 0.0
        %1982 = vmatpush1.msra.mxu0 0.0
        %1983 = vmatprep.subr.mxu0 0.0
        %1984 = vmatpush1.msra.mxu0 0.0
        %1985 = vmatprep.subr.mxu0 0.0
        %1986 = vmatpush1.msra.mxu0 0.0
        %1987 = vmatprep.subr.mxu0 0.0
        %1988 = vmatpush1.msra.mxu0 0.0
        %1989 = vmatprep.subr.mxu0 0.0
        %1990 = vmatpush1.msra.mxu0 0.0
        %1991 = vmatprep.subr.mxu0 0.0
        %1992 = vmatpush1.msra.mxu0 %v1956
        %1993 = vmatprep.subr.mxu0 0.0
        %1994 = vmatpush2.msra.mxu0 0.0
        %1995 = vmatprep.subr.mxu0 0.0
        %1996 = vmatpush2.msra.mxu0 0.0
        %1997 = vmatprep.subr.mxu0 0.0
        %1998 = vmatpush2.msra.mxu0 0.0
        %1999 = vmatprep.subr.mxu0 0.0
        %2000 = vmatpush2.msra.mxu0 0.0
        %2001 = vmatprep.subr.mxu0 0.0
        %2002 = vmatpush2.msra.mxu0 0.0
        %2003 = vmatprep.subr.mxu0 0.0
        %2004 = vmatpush2.msra.mxu0 0.0
        %2005 = vmatprep.subr.mxu0 0.0
        %2006 = vmatpush2.msra.mxu0 0.0
        %2007 = vmatprep.subr.mxu0 0.0
        %2008 = vmatpush2.msra.mxu0 0.0
        %2009 = vmatprep.subr.mxu0 0.0
        %2010 = vmatpush2.msra.mxu0 0.0
        %2011 = vmatprep.subr.mxu0 0.0
        %2012 = vmatpush2.msra.mxu0 0.0
        %2013 = vmatprep.subr.mxu0 0.0
        %2014 = vmatpush2.msra.mxu0 0.0
        %2015 = vmatprep.subr.mxu0 0.0
        %2016 = vmatpush2.msra.mxu0 0.0
        %2017 = vmatprep.subr.mxu0 0.0
        %2018 = vmatpush2.msra.mxu0 0.0
        %2019 = vmatprep.subr.mxu0 0.0
        %2020 = vmatpush2.msra.mxu0 0.0
        %2021 = vmatprep.subr.mxu0 0.0
        %2022 = vmatpush2.msra.mxu0 0.0
        %2023 = vmatprep.subr.mxu0 0.0
        %2024 = vmatpush2.msra.mxu0 0.0
        %2025 = vmatprep.mubr.f32.mxu0 0.0
        %2026 = vmatmul.mubr.f32.gmra.mxu0 %v1959
        %v2027 = vpop.f32.mrf.mxu0
        %v2028 = vadd.f32 %v1957, %v2027
        %v2029 = vpop.f32.mrf.mxu0
        %2030 = vdwg.mxu0
        %v2031 = vmax.f32 %v2028, 0.0
        %v2032 = vld [vmem:[%s13] sm:$0xff]
        %v2033 = vld [vmem:[%s14] sm:$0x1]
        %v2035 = vsel %vm990, %v2031, 0
        %2037 = vmatprep.subr.mxu0 0.0
        %2038 = vmatpush1.msra.mxu0 0.0
        %2039 = vmatprep.subr.mxu0 0.0
        %2040 = vmatpush1.msra.mxu0 0.0
        %2041 = vmatprep.subr.mxu0 0.0
        %2042 = vmatpush1.msra.mxu0 0.0
        %2043 = vmatprep.subr.mxu0 0.0
        %2044 = vmatpush1.msra.mxu0 0.0
        %2045 = vmatprep.subr.mxu0 0.0
        %2046 = vmatpush1.msra.mxu0 0.0
        %2047 = vmatprep.subr.mxu0 0.0
        %2048 = vmatpush1.msra.mxu0 0.0
        %2049 = vmatprep.subr.mxu0 0.0
        %2050 = vmatpush1.msra.mxu0 0.0
        %2051 = vmatprep.subr.mxu0 0.0
        %2052 = vmatpush1.msra.mxu0 0.0
        %2053 = vmatprep.subr.mxu0 0.0
        %2054 = vmatpush1.msra.mxu0 0.0
        %2055 = vmatprep.subr.mxu0 0.0
        %2056 = vmatpush1.msra.mxu0 0.0
        %2057 = vmatprep.subr.mxu0 0.0
        %2058 = vmatpush1.msra.mxu0 0.0
        %2059 = vmatprep.subr.mxu0 0.0
        %2060 = vmatpush1.msra.mxu0 0.0
        %2061 = vmatprep.subr.mxu0 0.0
        %2062 = vmatpush1.msra.mxu0 0.0
        %2063 = vmatprep.subr.mxu0 0.0
        %2064 = vmatpush1.msra.mxu0 0.0
        %2065 = vmatprep.subr.mxu0 0.0
        %2066 = vmatpush1.msra.mxu0 0.0
        %2067 = vmatprep.subr.mxu0 0.0
        %2068 = vmatpush1.msra.mxu0 %v2032
        %2069 = vmatprep.subr.mxu0 0.0
        %2070 = vmatpush2.msra.mxu0 0.0
        %2071 = vmatprep.subr.mxu0 0.0
        %2072 = vmatpush2.msra.mxu0 0.0
        %2073 = vmatprep.subr.mxu0 0.0
        %2074 = vmatpush2.msra.mxu0 0.0
        %2075 = vmatprep.subr.mxu0 0.0
        %2076 = vmatpush2.msra.mxu0 0.0
        %2077 = vmatprep.subr.mxu0 0.0
        %2078 = vmatpush2.msra.mxu0 0.0
        %2079 = vmatprep.subr.mxu0 0.0
        %2080 = vmatpush2.msra.mxu0 0.0
        %2081 = vmatprep.subr.mxu0 0.0
        %2082 = vmatpush2.msra.mxu0 0.0
        %2083 = vmatprep.subr.mxu0 0.0
        %2084 = vmatpush2.msra.mxu0 0.0
        %2085 = vmatprep.subr.mxu0 0.0
        %2086 = vmatpush2.msra.mxu0 0.0
        %2087 = vmatprep.subr.mxu0 0.0
        %2088 = vmatpush2.msra.mxu0 0.0
        %2089 = vmatprep.subr.mxu0 0.0
        %2090 = vmatpush2.msra.mxu0 0.0
        %2091 = vmatprep.subr.mxu0 0.0
        %2092 = vmatpush2.msra.mxu0 0.0
        %2093 = vmatprep.subr.mxu0 0.0
        %2094 = vmatpush2.msra.mxu0 0.0
        %2095 = vmatprep.subr.mxu0 0.0
        %2096 = vmatpush2.msra.mxu0 0.0
        %2097 = vmatprep.subr.mxu0 0.0
        %2098 = vmatpush2.msra.mxu0 0.0
        %2099 = vmatprep.subr.mxu0 0.0
        %2100 = vmatpush2.msra.mxu0 0.0
        %2101 = vmatprep.mubr.f32.mxu0 0.0
        %2102 = vmatmul.mubr.f32.gmra.mxu0 %v2035
        %v2103 = vpop.f32.mrf.mxu0
        %v2104 = vadd.f32 %v2033, %v2103
        %v2105 = vpop.f32.mrf.mxu0
        %2106 = vdwg.mxu0
        %vm2107 = vcmask 24576
        %2108 = vst.msk [vmem:[%s550] sm:$0x1] %vm2107, %v2104
        %s2109 = sand.u32 %s360, 1
        %s2110 = scalar_lea.sflag [#allocation4], %s2109
        %s2111 = sand.u32 %s360, 1
        %s2112 = scalar_lea.vmem [#allocation11], %s2111
        // Predicated region
        $region101: #{tpu_custom_call.1} parent=79 // pred_check
          %p2113 = pneg %p370
        $region102: #{tpu_custom_call.1} parent=79 // pred_check_branch
          %2115 = sbr.rel (%p2113) target = $region104
        $region103: #{tpu_custom_call.1} parent=79 // pred_region
          %s2117 = ssub.s32 16, 16
          %2118 = vsyncadd %s2110, %s2117
          %s2119 = smul.addr %s32, 16
          %s2120 = scalar_lea.hbm %s15, %s2119
          %s2122 = sshll.u32 %s2112, 4
          %s2123 = int_to_ptr.vmem [resolvable:$true] %s2122
          %2125 = dma.vmem_to_hbm [thread:$0]  %s2123, 16, %s2120, %s2110
        $region104: #{tpu_custom_call.1} parent=79 // pred_fallthru
          _
      $region80: #{tpu_custom_call.1} parent=5 // pred_fallthru
        _
      %p2126 = scmp.le.s32.totalorder 2, %s27
      // Predicated region
      $region105: #{tpu_custom_call.1} parent=5 // pred_check
        %p2127 = pneg %p2126
      $region106: #{tpu_custom_call.1} parent=5 // pred_check_branch
        %2129 = sbr.rel (%p2127) target = $region108
      $region107: #{tpu_custom_call.1} parent=5 // pred_region
        %s2130 = ssub.s32 %s27, 2
        // Predicated region
        $region109: #{tpu_custom_call.1} parent=107 // pred_check
          %p2131 = pneg %p376
        $region110: #{tpu_custom_call.1} parent=107 // pred_check_branch
          %2133 = sbr.rel (%p2131) target = $region112
        $region111: #{tpu_custom_call.1} parent=107 // pred_region
          %s2134 = sand.u32 %s361, 1
          %s2135 = scalar_lea.sflag [#allocation4], %s2134
          %s2136 = sand.u32 %s361, 1
          %s2137 = scalar_lea.vmem [#allocation11], %s2136
          %2138 = dma.done %s2135, 16
        $region112: #{tpu_custom_call.1} parent=107 // pred_fallthru
          _
      $region108: #{tpu_custom_call.1} parent=5 // pred_fallthru
        _
    $region6: #{tpu_custom_call.1} parent=1 // loop_footer
      %s31 = sadd.s32 1, %s27
    $region7: #{tpu_custom_call.1} parent=1 // loop_footer_branch
      %26 = sbr.rel target = $region3
    $region8: #{tpu_custom_call.1} parent=1 // loop_exit
      _
    %2139 = vsyncpa [#allocation3], 1
    %s2140 = scalar_lea.sflag [#allocation3], 1
    %2141 = vsyncpa %s2140, 1
    %2142 = vsyncpa [#allocation6], 1
    %2143 = vsyncpa [#allocation9], 1
    %2144 = vsyncpa [#allocation4], 1
    %s2145 = scalar_lea.sflag [#allocation4], 1
    %2146 = vsyncpa %s2145, 1

</llo_original>
